<compile_context>
chip_gen: v7x
topology: tpu7x:2x2x1
jax: 0.10.0
libtpu: 0.0.40
codegen_flags: <defaults>
</compile_context>

<pallas_src>
import functools

import jax
import jax.numpy as jnp
from jax.experimental import pallas as pl
from jax.experimental.pallas import tpu as pltpu


# ----------------------------- Pallas kernels ------------------------------


def cf_stage1_fused_kernel(x_ref, y_ref, w1_ref, b1_ref,
                           wax_ref, way_ref, batt_ref, out_ref, *, mm_dtype):
    """conv1(1x1)+BN (scale folded into w1) + attention fusion, lane-dense.

    x_ref: (1, Cin, TQ), y_ref: (1, Cmid, TQ), out_ref: (1, Cmid, TQ).
    """
    x = x_ref[0]                                           # (Cin, TQ)
    y = y_ref[0]                                           # (Cmid, TQ)
    x1 = jnp.dot(w1_ref[...].astype(mm_dtype), x.astype(mm_dtype),
                 preferred_element_type=jnp.float32) + b1_ref[...]
    # att_conv(concat([x1, y], C)) == Wx @ x1 + Wy @ y + b  -> (2, TQ)
    logits = (jnp.dot(wax_ref[...].astype(mm_dtype), x1.astype(mm_dtype),
                      preferred_element_type=jnp.float32)
              + jnp.dot(way_ref[...].astype(mm_dtype), y.astype(mm_dtype),
                        preferred_element_type=jnp.float32)
              + batt_ref[...])
    z = jax.nn.sigmoid(logits)                             # (2, TQ), EUP
    out_ref[0] = x1 * z[0:1, :] + y * z[1:2, :]


def cf_stage1_plain_kernel(x_ref, w1_ref, b1_ref, out_ref, *, mm_dtype):
    """conv1(1x1)+BN (scale folded into w1), fuse=False path."""
    out_ref[0] = (jnp.dot(w1_ref[...].astype(mm_dtype),
                          x_ref[0].astype(mm_dtype),
                          preferred_element_type=jnp.float32)
                  + b1_ref[...])


def offset_conv_kernel(mask_ref, x_ref, woff_ref, off_ref, *, H, W, mm_dtype):
    """LIC offset conv: 3x3, stride 1, pad 1, no bias, on one (Cmid, HW) image.

    The 9 taps are realized as lane-rolled views of the flattened image
    (pltpu.roll along the HW lane axis) multiplied by precomputed per-tap
    edge masks (zero-padding semantics), so no im2col tensor ever exists.

    mask_ref: (9, HW) f32 -- 1.0 where the shifted pixel is in-bounds.
    x_ref   : (1, Cmid, HW)
    woff_ref: (9, 18, Cmid)
    off_ref : (1, 18, HW)
    """
    HW = H * W
    x = x_ref[0]                                           # (Cmid, HW)
    n_off = off_ref.shape[1]                               # 18
    acc = jnp.zeros((n_off, HW), jnp.float32)
    for k in range(9):
        dh, dw = k // 3 - 1, k % 3 - 1
        d = dh * W + dw                                    # flattened shift
        if d == 0:
            shifted = x                                    # centre tap: no mask
        else:
            # want shifted[:, p] == x[:, p + d]  (jnp.roll semantics)
            shifted = pltpu.roll(x, shift=(-d) % HW, axis=1)
            shifted = shifted * mask_ref[k:k + 1, :]       # zero padding
        acc = acc + jnp.dot(woff_ref[k].astype(mm_dtype),
                            shifted.astype(mm_dtype),
                            preferred_element_type=jnp.float32)
    off_ref[0] = acc


def deform_matmul_bn_kernel(s_ref, w_ref, b2_ref, out_ref, *, mm_dtype):
    """Deformable-conv channel contraction + BN bias on a lane-dense tile.

    s_ref: (1, 9*Cmid, TQ) bilinearly sampled taps (tap-major channel order),
    w_ref: (Cout, 9*Cmid) with BN scale pre-folded, out_ref: (1, Cout, TQ).
    """
    out_ref[0] = (jnp.dot(w_ref[...].astype(mm_dtype),
                          s_ref[0].astype(mm_dtype),
                          preferred_element_type=jnp.float32)
                  + b2_ref[...])


# --------------------------------- glue ------------------------------------


def _nearest_resize_nchw(y, H, W):
    """F.interpolate(mode='nearest') to (H, W); static-index gather."""
    Hy, Wy = y.shape[2], y.shape[3]
    ih = (jnp.arange(H) * Hy) // H
    iw = (jnp.arange(W) * Wy) // W
    return y[:, :, ih][:, :, :, iw]


def _bilinear_sample_taps(x_flat, off, H, W):
    """4-corner bilinear gather for the 9 deformable taps (XLA glue, O(HW*C)).

    x_flat: (N, Cmid, HW), off: (N, 18, HW) with [dy, dx] per tap (mmcv order).
    Returns (N, 9*Cmid, HW), tap-major channel order.
    """
    N, Cmid, HW = x_flat.shape
    p = jnp.arange(HW)
    ph = (p // W).astype(jnp.float32)[None, :]
    pw = (p % W).astype(jnp.float32)[None, :]
    taps = []
    for k in range(9):
        kh, kw = divmod(k, 3)
        sy = ph + float(kh - 1) + off[:, 2 * k, :]
        sx = pw + float(kw - 1) + off[:, 2 * k + 1, :]
        y0 = jnp.floor(sy)
        x0 = jnp.floor(sx)
        wy1 = sy - y0
        wx1 = sx - x0
        samp = jnp.zeros((N, Cmid, HW), jnp.float32)
        for cy, cx, wgt in ((y0, x0, (1.0 - wy1) * (1.0 - wx1)),
                            (y0, x0 + 1.0, (1.0 - wy1) * wx1),
                            (y0 + 1.0, x0, wy1 * (1.0 - wx1)),
                            (y0 + 1.0, x0 + 1.0, wy1 * wx1)):
            valid = ((cy >= 0.0) & (cy <= H - 1.0) &
                     (cx >= 0.0) & (cx <= W - 1.0))
            cyi = jnp.clip(cy, 0.0, H - 1.0).astype(jnp.int32)
            cxi = jnp.clip(cx, 0.0, W - 1.0).astype(jnp.int32)
            idx = cyi * W + cxi                             # (N, HW)
            g = jnp.take_along_axis(
                x_flat, jnp.broadcast_to(idx[:, None, :], (N, Cmid, HW)),
                axis=2)
            samp = samp + jnp.where(valid, wgt, 0.0)[:, None, :] * g
        taps.append(samp)
    return jnp.concatenate(taps, axis=1)


def _edge_masks(H, W):
    """(9, HW) per-tap in-bounds masks for the 3x3 zero-padded conv."""
    p = jnp.arange(H * W)
    prow = p // W
    pcol = p % W
    masks = []
    for k in range(9):
        dh, dw = k // 3 - 1, k % 3 - 1
        valid = ((prow + dh >= 0) & (prow + dh <= H - 1) &
                 (pcol + dw >= 0) & (pcol + dw <= W - 1))
        masks.append(valid.astype(jnp.float32))
    return jnp.stack(masks, axis=0)


def _pick_spatial_tile(hw):
    for t in (512, 256, 128):
        if hw % t == 0:
            return t
    return hw


# ------------------------------ host wrapper -------------------------------


@functools.partial(jax.jit, static_argnames=("fuse", "mm_dtype"))
def cf_forward(x, params, y=None, fuse=True, mm_dtype=jnp.float32):
    """x: (N, Cin, H, W) NCHW.  y (if fuse): (N, Cmid, Hy, Wy) NCHW.

    Returns (y_out, x_mid) matching the torch module's (y, x).
    mm_dtype: operand dtype for MXU matmuls (jnp.bfloat16 on v6e/v7x)."""
    N, Cin, H, W = x.shape
    Cmid = params["w1"].shape[0]
    Cout = params["wdef"].shape[0]
    HW = H * W
    TQ = _pick_spatial_tile(HW)
    NQ = HW // TQ
    x_flat = x.reshape(N, Cin, HW)

    # Fold BN scales into the conv weights (exact; weights are tiny).
    w1_f = params["w1"] * params["bn1_scale"]              # (Cmid, Cin)
    b1_f = params["bn1_bias"]                              # (Cmid, 1)
    wdef_f = params["wdef"] * params["bn2_scale"]          # (Cout, 9*Cmid)
    b2_f = params["bn2_bias"]                              # (Cout, 1)

    par2 = pltpu.CompilerParams(dimension_semantics=("parallel", "parallel"))
    par1 = pltpu.CompilerParams(dimension_semantics=("parallel",))

    # ---- stage 1: 1x1 conv + BN (+ attention fusion), spatially tiled ----
    if fuse:
        y_up = _nearest_resize_nchw(y, H, W).reshape(N, Cmid, HW)
        x_mid_flat = pl.pallas_call(
            functools.partial(cf_stage1_fused_kernel, mm_dtype=mm_dtype),
            out_shape=jax.ShapeDtypeStruct((N, Cmid, HW), jnp.float32),
            grid=(N, NQ),
            in_specs=[
                pl.BlockSpec((1, Cin, TQ), lambda n, q: (n, 0, q)),
                pl.BlockSpec((1, Cmid, TQ), lambda n, q: (n, 0, q)),
                pl.BlockSpec((Cmid, Cin), lambda n, q: (0, 0)),
                pl.BlockSpec((Cmid, 1), lambda n, q: (0, 0)),
                pl.BlockSpec((2, Cmid), lambda n, q: (0, 0)),
                pl.BlockSpec((2, Cmid), lambda n, q: (0, 0)),
                pl.BlockSpec((2, 1), lambda n, q: (0, 0)),
            ],
            out_specs=pl.BlockSpec((1, Cmid, TQ), lambda n, q: (n, 0, q)),
            compiler_params=par2,
        )(x_flat, y_up, w1_f, b1_f,
          params["watt_x"], params["watt_y"], params["batt"])
    else:
        x_mid_flat = pl.pallas_call(
            functools.partial(cf_stage1_plain_kernel, mm_dtype=mm_dtype),
            out_shape=jax.ShapeDtypeStruct((N, Cmid, HW), jnp.float32),
            grid=(N, NQ),
            in_specs=[
                pl.BlockSpec((1, Cin, TQ), lambda n, q: (n, 0, q)),
                pl.BlockSpec((Cmid, Cin), lambda n, q: (0, 0)),
                pl.BlockSpec((Cmid, 1), lambda n, q: (0, 0)),
            ],
            out_specs=pl.BlockSpec((1, Cmid, TQ), lambda n, q: (n, 0, q)),
            compiler_params=par2,
        )(x_flat, w1_f, b1_f)

    # ---- stage 2: LIC offset conv (3x3, pad 1), fully in-kernel ----
    mask9 = _edge_masks(H, W)                              # constant (9, HW)
    off_flat = pl.pallas_call(
        functools.partial(offset_conv_kernel, H=H, W=W, mm_dtype=mm_dtype),
        out_shape=jax.ShapeDtypeStruct((N, 18, HW), jnp.float32),
        grid=(N,),
        in_specs=[
            pl.BlockSpec((9, HW), lambda n: (0, 0)),
            pl.BlockSpec((1, Cmid, HW), lambda n: (n, 0, 0)),
            pl.BlockSpec((9, 18, Cmid), lambda n: (0, 0, 0)),
        ],
        out_specs=pl.BlockSpec((1, 18, HW), lambda n: (n, 0, 0)),
        compiler_params=par1,
    )(mask9, x_mid_flat, params["woff"])

    # ---- glue: deformable 4-corner bilinear gather (XLA, O(HW*Cmid)) ----
    sampled = _bilinear_sample_taps(x_mid_flat, off_flat, H, W)
    if mm_dtype != jnp.float32:
        sampled = sampled.astype(mm_dtype)                 # halve HBM read

    # ---- stage 3: deformable channel contraction + BN, spatially tiled ----
    y_out_flat = pl.pallas_call(
        functools.partial(deform_matmul_bn_kernel, mm_dtype=mm_dtype),
        out_shape=jax.ShapeDtypeStruct((N, Cout, HW), jnp.float32),
        grid=(N, NQ),
        in_specs=[
            pl.BlockSpec((1, 9 * Cmid, TQ), lambda n, q: (n, 0, q)),
            pl.BlockSpec((Cout, 9 * Cmid), lambda n, q: (0, 0)),
            pl.BlockSpec((Cout, 1), lambda n, q: (0, 0)),
        ],
        out_specs=pl.BlockSpec((1, Cout, TQ), lambda n, q: (n, 0, q)),
        compiler_params=par2,
    )(sampled, wdef_f, b2_f)

    return (y_out_flat.reshape(N, Cout, H, W),
            x_mid_flat.reshape(N, Cmid, H, W))


# ---------------------------- parameter setup ------------------------------


def init_params(key, cin, cmid, cout, eps=1e-5):
    ks = jax.random.split(key, 5)
    # conv1: torch weight (cmid, cin, 1, 1) -> (cmid, cin)
    w1 = 0.2 * jax.random.normal(ks[0], (cmid, cin), jnp.float32)
    # BN1 (inference-mode folding)
    g1 = 1.0 + 0.10 * jnp.arange(cmid, dtype=jnp.float32)
    b1 = 0.05 * jnp.arange(cmid, dtype=jnp.float32)
    m1 = 0.02 * jnp.arange(cmid, dtype=jnp.float32)
    v1 = 1.0 + 0.03 * jnp.arange(cmid, dtype=jnp.float32)
    s1 = g1 / jnp.sqrt(v1 + eps)
    # att conv: torch weight (2, 2*cmid, 1, 1), bias (2,)
    watt = 0.2 * jax.random.normal(ks[1], (2, 2 * cmid), jnp.float32)
    batt = 0.1 * jax.random.normal(ks[2], (2,), jnp.float32)
    # LIC offset conv: torch (18, cmid, 3, 3) -> (9, 18, cmid), k = kh*3+kw
    woff_t = 0.05 * jax.random.normal(ks[3], (18, cmid, 3, 3), jnp.float32)
    woff = jnp.transpose(woff_t.reshape(18, cmid, 9), (2, 0, 1))
    # deformable conv: torch (cout, cmid, 3, 3) -> (cout, 9*cmid), tap-major
    wdef_t = 0.2 * jax.random.normal(ks[4], (cout, cmid, 3, 3), jnp.float32)
    wdef = jnp.transpose(wdef_t.reshape(cout, cmid, 9),
                         (0, 2, 1)).reshape(cout, 9 * cmid)
    # BN2 (inference-mode folding)
    g2 = 1.0 + 0.05 * jnp.arange(cout, dtype=jnp.float32)
    b2 = -0.03 * jnp.arange(cout, dtype=jnp.float32)
    m2 = 0.01 * jnp.arange(cout, dtype=jnp.float32)
    v2 = 1.0 + 0.04 * jnp.arange(cout, dtype=jnp.float32)
    s2 = g2 / jnp.sqrt(v2 + eps)
    return dict(
        w1=w1,
        bn1_scale=s1.reshape(cmid, 1),
        bn1_bias=(b1 - m1 * s1).reshape(cmid, 1),
        watt_x=watt[:, :cmid],
        watt_y=watt[:, cmid:],
        batt=batt.reshape(2, 1),
        woff=woff,
        wdef=wdef,
        bn2_scale=s2.reshape(cout, 1),
        bn2_bias=(b2 - m2 * s2).reshape(cout, 1),
    )


# --------------------------- pure-JAX reference ----------------------------


def cf_reference(x, params, y, fuse=True):
    N, Cin, H, W = x.shape
    Cmid = params["w1"].shape[0]
    Cout = params["wdef"].shape[0]
    hp = jax.lax.Precision.HIGHEST
    x1 = jnp.einsum("oc,nchw->nohw", params["w1"], x, precision=hp)
    x1 = (x1 * params["bn1_scale"].reshape(1, Cmid, 1, 1)
          + params["bn1_bias"].reshape(1, Cmid, 1, 1))
    if fuse:
        y_up = _nearest_resize_nchw(y, H, W)
        logits = (jnp.einsum("oc,nchw->nohw", params["watt_x"], x1,
                             precision=hp)
                  + jnp.einsum("oc,nchw->nohw", params["watt_y"], y_up,
                               precision=hp)
                  + params["batt"].reshape(1, 2, 1, 1))
        z = jax.nn.sigmoid(logits)
        x1 = x1 * z[:, 0:1] + y_up * z[:, 1:2]
    # LIC offset conv (3x3, stride 1, pad 1, no bias)
    woff_t = jnp.transpose(params["woff"].reshape(3, 3, 18, Cmid),
                           (2, 3, 0, 1))                    # (18, Cmid, 3, 3)
    off = jax.lax.conv_general_dilated(
        x1, woff_t, window_strides=(1, 1), padding=((1, 1), (1, 1)),
        dimension_numbers=("NCHW", "OIHW", "NCHW"), precision=hp)
    # deformable 3x3 conv (bilinear sampling, zero outside)
    x1_nhwc = jnp.transpose(x1, (0, 2, 3, 1))
    wdef_k = params["wdef"].reshape(Cout, 9, Cmid)
    ph = jnp.arange(H, dtype=jnp.float32)[None, :, None]
    pw = jnp.arange(W, dtype=jnp.float32)[None, None, :]
    bidx = jnp.arange(N).reshape(N, 1, 1)
    out = jnp.zeros((N, Cout, H, W), jnp.float32)
    for k in range(9):
        kh, kw = divmod(k, 3)
        sy = ph + (kh - 1) + off[:, 2 * k]
        sx = pw + (kw - 1) + off[:, 2 * k + 1]
        y0 = jnp.floor(sy)
        x0 = jnp.floor(sx)
        wy1 = sy - y0
        wx1 = sx - x0
        samp = jnp.zeros((N, H, W, Cmid), jnp.float32)
        for cy, cx, wgt in ((y0, x0, (1 - wy1) * (1 - wx1)),
                            (y0, x0 + 1, (1 - wy1) * wx1),
                            (y0 + 1, x0, wy1 * (1 - wx1)),
                            (y0 + 1, x0 + 1, wy1 * wx1)):
            valid = (cy >= 0) & (cy <= H - 1) & (cx >= 0) & (cx <= W - 1)
            cyi = jnp.clip(cy, 0, H - 1).astype(jnp.int32)
            cxi = jnp.clip(cx, 0, W - 1).astype(jnp.int32)
            g = x1_nhwc[bidx, cyi, cxi, :]
            samp = samp + jnp.where(valid, wgt, 0.0)[..., None] * g
        out = out + jnp.einsum("nhwc,oc->nohw", samp, wdef_k[:, k, :],
                               precision=hp)
    out = (out * params["bn2_scale"].reshape(1, Cout, 1, 1)
           + params["bn2_bias"].reshape(1, Cout, 1, 1))
    return out, x1


# ---------------------------------- main -----------------------------------


if __name__ == "__main__":
    key = jax.random.PRNGKey(0)
    N, Cin, Cmid, Cout = 2, 4, 8, 8
    H = W = 16
    Hy = Wy = 8

    kx, ky, kp = jax.random.split(key, 3)
    x = jax.random.normal(kx, (N, Cin, H, W), jnp.float32)          # NCHW
    y_teacher = jax.random.normal(ky, (N, Cmid, Hy, Wy), jnp.float32)
    params = init_params(kp, Cin, Cmid, Cout)

    y_out, x_mid = cf_forward(x, params, y=y_teacher, fuse=True)
    jax.block_until_ready((y_out, x_mid))

    y_ref, x_mid_ref = cf_reference(x, params, y_teacher, fuse=True)
    assert y_out.shape == (N, Cout, H, W) and x_mid.shape == (N, Cmid, H, W)
    assert bool(jnp.allclose(x_mid, x_mid_ref, atol=2e-3, rtol=2e-3))
    assert bool(jnp.allclose(y_out, y_ref, atol=2e-3, rtol=2e-3))
    print("KERNEL_OK")
</pallas_src>

<mosaic_0001>
module attributes {stable_mosaic.version = 11 : i64} {
  func.func private @main(%arg0: i32) attributes {dimension_semantics = [#tpu.dimension_semantics<core_parallel>], iteration_bounds = array<i64: 2>, tpu.core_type = #tpu.core_type<sc_scalar_subcore>, window_params = []} {
    return
  }
}

module attributes {stable_mosaic.version = 11 : i64} {
  func.func private @main(%arg0: i32) attributes {dimension_semantics = [#tpu.dimension_semantics<core_parallel>], iteration_bounds = array<i64: 2>, tpu.core_type = #tpu.core_type<sc_scalar_subcore>, window_params = []} {
    return
  }
}

module attributes {stable_mosaic.version = 11 : i64} {
  func.func @cf_stage1_fused_kernel(%arg0: i32, %arg1: i32, %arg2: memref<1x4x256xf32, #tpu.memory_space<vmem>>, %arg3: memref<1x8x256xf32, #tpu.memory_space<vmem>>, %arg4: memref<8x4xf32, #tpu.memory_space<vmem>>, %arg5: memref<8x1xf32, #tpu.memory_space<vmem>>, %arg6: memref<2x8xf32, #tpu.memory_space<vmem>>, %arg7: memref<2x8xf32, #tpu.memory_space<vmem>>, %arg8: memref<2x1xf32, #tpu.memory_space<vmem>>, %arg9: memref<1x8x256xf32, #tpu.memory_space<vmem>>) attributes {dimension_semantics = [#tpu.dimension_semantics<parallel>, #tpu.dimension_semantics<parallel>], iteration_bounds = array<i64: 2, 1>, scalar_prefetch = 0 : i64, scratch_operands = 0 : i64, tpu.core_type = #tpu.core_type<tc>, window_params = [{transform_indices = @transform_0, window_bounds = array<i64: 1, 4, 256>}, {transform_indices = @transform_1, window_bounds = array<i64: 1, 8, 256>}, {pipeline_mode = #tpu.pipeline_mode<synchronous>, transform_indices = @transform_2, window_bounds = array<i64: 8, 4>}, {pipeline_mode = #tpu.pipeline_mode<synchronous>, transform_indices = @transform_3, window_bounds = array<i64: 8, 1>}, {pipeline_mode = #tpu.pipeline_mode<synchronous>, transform_indices = @transform_4, window_bounds = array<i64: 2, 8>}, {pipeline_mode = #tpu.pipeline_mode<synchronous>, transform_indices = @transform_5, window_bounds = array<i64: 2, 8>}, {pipeline_mode = #tpu.pipeline_mode<synchronous>, transform_indices = @transform_6, window_bounds = array<i64: 2, 1>}, {transform_indices = @transform_7, window_bounds = array<i64: 1, 8, 256>}]} {
    %c0 = arith.constant 0 : index
    %c0_0 = arith.constant 0 : index
    %c0_1 = arith.constant 0 : index
    %0 = vector.load %arg2[%c0, %c0_0, %c0_1] : memref<1x4x256xf32, #tpu.memory_space<vmem>>, vector<1x4x256xf32>
    %1 = vector.shape_cast %0 : vector<1x4x256xf32> to vector<4x256xf32>
    %c0_2 = arith.constant 0 : index
    %c0_3 = arith.constant 0 : index
    %c0_4 = arith.constant 0 : index
    %2 = vector.load %arg3[%c0_2, %c0_3, %c0_4] : memref<1x8x256xf32, #tpu.memory_space<vmem>>, vector<1x8x256xf32>
    %3 = vector.shape_cast %2 : vector<1x8x256xf32> to vector<8x256xf32>
    %c0_5 = arith.constant 0 : index
    %c0_6 = arith.constant 0 : index
    %4 = vector.load %arg4[%c0_5, %c0_6] : memref<8x4xf32, #tpu.memory_space<vmem>>, vector<8x4xf32>
    %cst = arith.constant dense<0.000000e+00> : vector<8x256xf32>
    %5 = tpu.matmul %4, %1, %cst {dimension_numbers = #tpu.dot_dimension_numbers<[1], [0], [0], [1], [0, 0, 1, 1], [], []>} : vector<8x4xf32>, vector<4x256xf32>, vector<8x256xf32> -> vector<8x256xf32>
    %c0_7 = arith.constant 0 : index
    %c0_8 = arith.constant 0 : index
    %6 = vector.load %arg5[%c0_7, %c0_8] : memref<8x1xf32, #tpu.memory_space<vmem>>, vector<8x1xf32>
    %7 = vector.broadcast %6 : vector<8x1xf32> to vector<8x256xf32>
    %8 = arith.addf %5, %7 : vector<8x256xf32>
    %c0_9 = arith.constant 0 : index
    %c0_10 = arith.constant 0 : index
    %9 = vector.load %arg6[%c0_9, %c0_10] : memref<2x8xf32, #tpu.memory_space<vmem>>, vector<2x8xf32>
    %cst_11 = arith.constant dense<0.000000e+00> : vector<2x256xf32>
    %10 = tpu.matmul %9, %8, %cst_11 {dimension_numbers = #tpu.dot_dimension_numbers<[1], [0], [0], [1], [0, 0, 1, 1], [], []>} : vector<2x8xf32>, vector<8x256xf32>, vector<2x256xf32> -> vector<2x256xf32>
    %c0_12 = arith.constant 0 : index
    %c0_13 = arith.constant 0 : index
    %11 = vector.load %arg7[%c0_12, %c0_13] : memref<2x8xf32, #tpu.memory_space<vmem>>, vector<2x8xf32>
    %cst_14 = arith.constant dense<0.000000e+00> : vector<2x256xf32>
    %12 = tpu.matmul %11, %3, %cst_14 {dimension_numbers = #tpu.dot_dimension_numbers<[1], [0], [0], [1], [0, 0, 1, 1], [], []>} : vector<2x8xf32>, vector<8x256xf32>, vector<2x256xf32> -> vector<2x256xf32>
    %13 = arith.addf %10, %12 : vector<2x256xf32>
    %c0_15 = arith.constant 0 : index
    %c0_16 = arith.constant 0 : index
    %14 = vector.load %arg8[%c0_15, %c0_16] : memref<2x1xf32, #tpu.memory_space<vmem>>, vector<2x1xf32>
    %15 = vector.broadcast %14 : vector<2x1xf32> to vector<2x256xf32>
    %16 = arith.addf %13, %15 : vector<2x256xf32>
    %17 = arith.negf %16 : vector<2x256xf32>
    %18 = math.exp %17 : vector<2x256xf32>
    %cst_17 = arith.constant 1.000000e+00 : f32
    %19 = vector.broadcast %cst_17 : f32 to vector<2x256xf32>
    %20 = arith.addf %19, %18 : vector<2x256xf32>
    %21 = arith.divf %19, %20 : vector<2x256xf32>
    %22 = vector.extract_strided_slice %21 {offsets = [0, 0], sizes = [1, 256], strides = [1, 1]} : vector<2x256xf32> to vector<1x256xf32>
    %23 = vector.broadcast %22 : vector<1x256xf32> to vector<8x256xf32>
    %24 = arith.mulf %8, %23 : vector<8x256xf32>
    %25 = vector.extract_strided_slice %21 {offsets = [1, 0], sizes = [1, 256], strides = [1, 1]} : vector<2x256xf32> to vector<1x256xf32>
    %26 = vector.broadcast %25 : vector<1x256xf32> to vector<8x256xf32>
    %27 = arith.mulf %3, %26 : vector<8x256xf32>
    %28 = arith.addf %24, %27 : vector<8x256xf32>
    %c0_18 = arith.constant 0 : index
    %c0_19 = arith.constant 0 : index
    %c0_20 = arith.constant 0 : index
    %29 = vector.load %arg9[%c0_18, %c0_19, %c0_20] : memref<1x8x256xf32, #tpu.memory_space<vmem>>, vector<1x8x256xf32>
    %30 = vector.shape_cast %29 : vector<1x8x256xf32> to vector<8x256xf32>
    %31 = vector.shape_cast %28 : vector<8x256xf32> to vector<1x8x256xf32>
    tpu.vector_store %arg9[%c0_18, %c0_19, %c0_20], %31 {strides = array<i32>} : memref<1x8x256xf32, #tpu.memory_space<vmem>>, vector<1x8x256xf32>,
    return
  }
  func.func @transform_0(%arg0: i32, %arg1: i32) -> (i32, i32, i32) {
    %c0_i32 = arith.constant 0 : i32
    %c0_i32_0 = arith.constant 0 : i32
    return %arg0, %c0_i32, %arg1 : i32, i32, i32
  }
  func.func @transform_1(%arg0: i32, %arg1: i32) -> (i32, i32, i32) {
    %c0_i32 = arith.constant 0 : i32
    %c0_i32_0 = arith.constant 0 : i32
    return %arg0, %c0_i32, %arg1 : i32, i32, i32
  }
  func.func @transform_2(%arg0: i32, %arg1: i32) -> (i32, i32) {
    %c0_i32 = arith.constant 0 : i32
    %c0_i32_0 = arith.constant 0 : i32
    %c0_i32_1 = arith.constant 0 : i32
    return %c0_i32, %c0_i32_0 : i32, i32
  }
  func.func @transform_3(%arg0: i32, %arg1: i32) -> (i32, i32) {
    %c0_i32 = arith.constant 0 : i32
    %c0_i32_0 = arith.constant 0 : i32
    %c0_i32_1 = arith.constant 0 : i32
    return %c0_i32, %c0_i32_0 : i32, i32
  }
  func.func @transform_4(%arg0: i32, %arg1: i32) -> (i32, i32) {
    %c0_i32 = arith.constant 0 : i32
    %c0_i32_0 = arith.constant 0 : i32
    %c0_i32_1 = arith.constant 0 : i32
    return %c0_i32, %c0_i32_0 : i32, i32
  }
  func.func @transform_5(%arg0: i32, %arg1: i32) -> (i32, i32) {
    %c0_i32 = arith.constant 0 : i32
    %c0_i32_0 = arith.constant 0 : i32
    %c0_i32_1 = arith.constant 0 : i32
    return %c0_i32, %c0_i32_0 : i32, i32
  }
  func.func @transform_6(%arg0: i32, %arg1: i32) -> (i32, i32) {
    %c0_i32 = arith.constant 0 : i32
    %c0_i32_0 = arith.constant 0 : i32
    %c0_i32_1 = arith.constant 0 : i32
    return %c0_i32, %c0_i32_0 : i32, i32
  }
  func.func @transform_7(%arg0: i32, %arg1: i32) -> (i32, i32, i32) {
    %c0_i32 = arith.constant 0 : i32
    %c0_i32_0 = arith.constant 0 : i32
    return %arg0, %c0_i32, %arg1 : i32, i32, i32
  }
}

module attributes {stable_mosaic.version = 11 : i64} {
  func.func @offset_conv_kernel(%arg0: i32, %arg1: memref<9x256xf32, #tpu.memory_space<vmem>>, %arg2: memref<1x8x256xf32, #tpu.memory_space<vmem>>, %arg3: memref<9x18x8xf32, #tpu.memory_space<vmem>>, %arg4: memref<1x18x256xf32, #tpu.memory_space<vmem>>) attributes {dimension_semantics = [#tpu.dimension_semantics<parallel>], iteration_bounds = array<i64: 2>, scalar_prefetch = 0 : i64, scratch_operands = 0 : i64, tpu.core_type = #tpu.core_type<tc>, window_params = [{pipeline_mode = #tpu.pipeline_mode<synchronous>, transform_indices = @transform_0, window_bounds = array<i64: 9, 256>}, {transform_indices = @transform_1, window_bounds = array<i64: 1, 8, 256>}, {pipeline_mode = #tpu.pipeline_mode<synchronous>, transform_indices = @transform_2, window_bounds = array<i64: 9, 18, 8>}, {transform_indices = @transform_3, window_bounds = array<i64: 1, 18, 256>}]} {
    %c0 = arith.constant 0 : index
    %c0_0 = arith.constant 0 : index
    %c0_1 = arith.constant 0 : index
    %0 = vector.load %arg2[%c0, %c0_0, %c0_1] : memref<1x8x256xf32, #tpu.memory_space<vmem>>, vector<1x8x256xf32>
    %1 = vector.shape_cast %0 : vector<1x8x256xf32> to vector<8x256xf32>
    %cst = arith.constant 0.000000e+00 : f32
    %2 = vector.broadcast %cst : f32 to vector<18x256xf32>
    %c17_i32 = arith.constant 17 : i32
    %3 = tpu.dynamic_rotate %1 by %c17_i32 dim 1 : vector<8x256xf32>, i32 -> vector<8x256xf32>
    %c0_2 = arith.constant 0 : index
    %c0_3 = arith.constant 0 : index
    %4 = vector.load %arg1[%c0_2, %c0_3] : memref<9x256xf32, #tpu.memory_space<vmem>>, vector<1x256xf32>
    %5 = vector.broadcast %4 : vector<1x256xf32> to vector<8x256xf32>
    %6 = arith.mulf %3, %5 : vector<8x256xf32>
    %c0_4 = arith.constant 0 : index
    %c0_5 = arith.constant 0 : index
    %c0_6 = arith.constant 0 : index
    %7 = vector.load %arg3[%c0_4, %c0_5, %c0_6] : memref<9x18x8xf32, #tpu.memory_space<vmem>>, vector<1x18x8xf32>
    %8 = vector.shape_cast %7 : vector<1x18x8xf32> to vector<18x8xf32>
    %cst_7 = arith.constant dense<0.000000e+00> : vector<18x256xf32>
    %9 = tpu.matmul %8, %6, %cst_7 {dimension_numbers = #tpu.dot_dimension_numbers<[1], [0], [0], [1], [0, 0, 1, 1], [], []>} : vector<18x8xf32>, vector<8x256xf32>, vector<18x256xf32> -> vector<18x256xf32>
    %10 = arith.addf %2, %9 : vector<18x256xf32>
    %c16_i32 = arith.constant 16 : i32
    %11 = tpu.dynamic_rotate %1 by %c16_i32 dim 1 : vector<8x256xf32>, i32 -> vector<8x256xf32>
    %c1 = arith.constant 1 : index
    %c0_8 = arith.constant 0 : index
    %12 = vector.load %arg1[%c1, %c0_8] : memref<9x256xf32, #tpu.memory_space<vmem>>, vector<1x256xf32>
    %13 = vector.broadcast %12 : vector<1x256xf32> to vector<8x256xf32>
    %14 = arith.mulf %11, %13 : vector<8x256xf32>
    %c1_9 = arith.constant 1 : index
    %c0_10 = arith.constant 0 : index
    %c0_11 = arith.constant 0 : index
    %15 = vector.load %arg3[%c1_9, %c0_10, %c0_11] : memref<9x18x8xf32, #tpu.memory_space<vmem>>, vector<1x18x8xf32>
    %16 = vector.shape_cast %15 : vector<1x18x8xf32> to vector<18x8xf32>
    %cst_12 = arith.constant dense<0.000000e+00> : vector<18x256xf32>
    %17 = tpu.matmul %16, %14, %cst_12 {dimension_numbers = #tpu.dot_dimension_numbers<[1], [0], [0], [1], [0, 0, 1, 1], [], []>} : vector<18x8xf32>, vector<8x256xf32>, vector<18x256xf32> -> vector<18x256xf32>
    %18 = arith.addf %10, %17 : vector<18x256xf32>
    %c15_i32 = arith.constant 15 : i32
    %19 = tpu.dynamic_rotate %1 by %c15_i32 dim 1 : vector<8x256xf32>, i32 -> vector<8x256xf32>
    %c2 = arith.constant 2 : index
    %c0_13 = arith.constant 0 : index
    %20 = vector.load %arg1[%c2, %c0_13] : memref<9x256xf32, #tpu.memory_space<vmem>>, vector<1x256xf32>
    %21 = vector.broadcast %20 : vector<1x256xf32> to vector<8x256xf32>
    %22 = arith.mulf %19, %21 : vector<8x256xf32>
    %c2_14 = arith.constant 2 : index
    %c0_15 = arith.constant 0 : index
    %c0_16 = arith.constant 0 : index
    %23 = vector.load %arg3[%c2_14, %c0_15, %c0_16] : memref<9x18x8xf32, #tpu.memory_space<vmem>>, vector<1x18x8xf32>
    %24 = vector.shape_cast %23 : vector<1x18x8xf32> to vector<18x8xf32>
    %cst_17 = arith.constant dense<0.000000e+00> : vector<18x256xf32>
    %25 = tpu.matmul %24, %22, %cst_17 {dimension_numbers = #tpu.dot_dimension_numbers<[1], [0], [0], [1], [0, 0, 1, 1], [], []>} : vector<18x8xf32>, vector<8x256xf32>, vector<18x256xf32> -> vector<18x256xf32>
    %26 = arith.addf %18, %25 : vector<18x256xf32>
    %c1_i32 = arith.constant 1 : i32
    %27 = tpu.dynamic_rotate %1 by %c1_i32 dim 1 : vector<8x256xf32>, i32 -> vector<8x256xf32>
    %c3 = arith.constant 3 : index
    %c0_18 = arith.constant 0 : index
    %28 = vector.load %arg1[%c3, %c0_18] : memref<9x256xf32, #tpu.memory_space<vmem>>, vector<1x256xf32>
    %29 = vector.broadcast %28 : vector<1x256xf32> to vector<8x256xf32>
    %30 = arith.mulf %27, %29 : vector<8x256xf32>
    %c3_19 = arith.constant 3 : index
    %c0_20 = arith.constant 0 : index
    %c0_21 = arith.constant 0 : index
    %31 = vector.load %arg3[%c3_19, %c0_20, %c0_21] : memref<9x18x8xf32, #tpu.memory_space<vmem>>, vector<1x18x8xf32>
    %32 = vector.shape_cast %31 : vector<1x18x8xf32> to vector<18x8xf32>
    %cst_22 = arith.constant dense<0.000000e+00> : vector<18x256xf32>
    %33 = tpu.matmul %32, %30, %cst_22 {dimension_numbers = #tpu.dot_dimension_numbers<[1], [0], [0], [1], [0, 0, 1, 1], [], []>} : vector<18x8xf32>, vector<8x256xf32>, vector<18x256xf32> -> vector<18x256xf32>
    %34 = arith.addf %26, %33 : vector<18x256xf32>
    %c4 = arith.constant 4 : index
    %c0_23 = arith.constant 0 : index
    %c0_24 = arith.constant 0 : index
    %35 = vector.load %arg3[%c4, %c0_23, %c0_24] : memref<9x18x8xf32, #tpu.memory_space<vmem>>, vector<1x18x8xf32>
    %36 = vector.shape_cast %35 : vector<1x18x8xf32> to vector<18x8xf32>
    %cst_25 = arith.constant dense<0.000000e+00> : vector<18x256xf32>
    %37 = tpu.matmul %36, %1, %cst_25 {dimension_numbers = #tpu.dot_dimension_numbers<[1], [0], [0], [1], [0, 0, 1, 1], [], []>} : vector<18x8xf32>, vector<8x256xf32>, vector<18x256xf32> -> vector<18x256xf32>
    %38 = arith.addf %34, %37 : vector<18x256xf32>
    %c255_i32 = arith.constant 255 : i32
    %39 = tpu.dynamic_rotate %1 by %c255_i32 dim 1 : vector<8x256xf32>, i32 -> vector<8x256xf32>
    %c5 = arith.constant 5 : index
    %c0_26 = arith.constant 0 : index
    %40 = vector.load %arg1[%c5, %c0_26] : memref<9x256xf32, #tpu.memory_space<vmem>>, vector<1x256xf32>
    %41 = vector.broadcast %40 : vector<1x256xf32> to vector<8x256xf32>
    %42 = arith.mulf %39, %41 : vector<8x256xf32>
    %c5_27 = arith.constant 5 : index
    %c0_28 = arith.constant 0 : index
    %c0_29 = arith.constant 0 : index
    %43 = vector.load %arg3[%c5_27, %c0_28, %c0_29] : memref<9x18x8xf32, #tpu.memory_space<vmem>>, vector<1x18x8xf32>
    %44 = vector.shape_cast %43 : vector<1x18x8xf32> to vector<18x8xf32>
    %cst_30 = arith.constant dense<0.000000e+00> : vector<18x256xf32>
    %45 = tpu.matmul %44, %42, %cst_30 {dimension_numbers = #tpu.dot_dimension_numbers<[1], [0], [0], [1], [0, 0, 1, 1], [], []>} : vector<18x8xf32>, vector<8x256xf32>, vector<18x256xf32> -> vector<18x256xf32>
    %46 = arith.addf %38, %45 : vector<18x256xf32>
    %c241_i32 = arith.constant 241 : i32
    %47 = tpu.dynamic_rotate %1 by %c241_i32 dim 1 : vector<8x256xf32>, i32 -> vector<8x256xf32>
    %c6 = arith.constant 6 : index
    %c0_31 = arith.constant 0 : index
    %48 = vector.load %arg1[%c6, %c0_31] : memref<9x256xf32, #tpu.memory_space<vmem>>, vector<1x256xf32>
    %49 = vector.broadcast %48 : vector<1x256xf32> to vector<8x256xf32>
    %50 = arith.mulf %47, %49 : vector<8x256xf32>
    %c6_32 = arith.constant 6 : index
    %c0_33 = arith.constant 0 : index
    %c0_34 = arith.constant 0 : index
    %51 = vector.load %arg3[%c6_32, %c0_33, %c0_34] : memref<9x18x8xf32, #tpu.memory_space<vmem>>, vector<1x18x8xf32>
    %52 = vector.shape_cast %51 : vector<1x18x8xf32> to vector<18x8xf32>
    %cst_35 = arith.constant dense<0.000000e+00> : vector<18x256xf32>
    %53 = tpu.matmul %52, %50, %cst_35 {dimension_numbers = #tpu.dot_dimension_numbers<[1], [0], [0], [1], [0, 0, 1, 1], [], []>} : vector<18x8xf32>, vector<8x256xf32>, vector<18x256xf32> -> vector<18x256xf32>
    %54 = arith.addf %46, %53 : vector<18x256xf32>
    %c240_i32 = arith.constant 240 : i32
    %55 = tpu.dynamic_rotate %1 by %c240_i32 dim 1 : vector<8x256xf32>, i32 -> vector<8x256xf32>
    %c7 = arith.constant 7 : index
    %c0_36 = arith.constant 0 : index
    %56 = vector.load %arg1[%c7, %c0_36] : memref<9x256xf32, #tpu.memory_space<vmem>>, vector<1x256xf32>
    %57 = vector.broadcast %56 : vector<1x256xf32> to vector<8x256xf32>
    %58 = arith.mulf %55, %57 : vector<8x256xf32>
    %c7_37 = arith.constant 7 : index
    %c0_38 = arith.constant 0 : index
    %c0_39 = arith.constant 0 : index
    %59 = vector.load %arg3[%c7_37, %c0_38, %c0_39] : memref<9x18x8xf32, #tpu.memory_space<vmem>>, vector<1x18x8xf32>
    %60 = vector.shape_cast %59 : vector<1x18x8xf32> to vector<18x8xf32>
    %cst_40 = arith.constant dense<0.000000e+00> : vector<18x256xf32>
    %61 = tpu.matmul %60, %58, %cst_40 {dimension_numbers = #tpu.dot_dimension_numbers<[1], [0], [0], [1], [0, 0, 1, 1], [], []>} : vector<18x8xf32>, vector<8x256xf32>, vector<18x256xf32> -> vector<18x256xf32>
    %62 = arith.addf %54, %61 : vector<18x256xf32>
    %c239_i32 = arith.constant 239 : i32
    %63 = tpu.dynamic_rotate %1 by %c239_i32 dim 1 : vector<8x256xf32>, i32 -> vector<8x256xf32>
    %c8 = arith.constant 8 : index
    %c0_41 = arith.constant 0 : index
    %64 = vector.load %arg1[%c8, %c0_41] : memref<9x256xf32, #tpu.memory_space<vmem>>, vector<1x256xf32>
    %65 = vector.broadcast %64 : vector<1x256xf32> to vector<8x256xf32>
    %66 = arith.mulf %63, %65 : vector<8x256xf32>
    %c8_42 = arith.constant 8 : index
    %c0_43 = arith.constant 0 : index
    %c0_44 = arith.constant 0 : index
    %67 = vector.load %arg3[%c8_42, %c0_43, %c0_44] : memref<9x18x8xf32, #tpu.memory_space<vmem>>, vector<1x18x8xf32>
    %68 = vector.shape_cast %67 : vector<1x18x8xf32> to vector<18x8xf32>
    %cst_45 = arith.constant dense<0.000000e+00> : vector<18x256xf32>
    %69 = tpu.matmul %68, %66, %cst_45 {dimension_numbers = #tpu.dot_dimension_numbers<[1], [0], [0], [1], [0, 0, 1, 1], [], []>} : vector<18x8xf32>, vector<8x256xf32>, vector<18x256xf32> -> vector<18x256xf32>
    %70 = arith.addf %62, %69 : vector<18x256xf32>
    %c0_46 = arith.constant 0 : index
    %c0_47 = arith.constant 0 : index
    %c0_48 = arith.constant 0 : index
    %71 = vector.load %arg4[%c0_46, %c0_47, %c0_48] : memref<1x18x256xf32, #tpu.memory_space<vmem>>, vector<1x18x256xf32>
    %72 = vector.shape_cast %71 : vector<1x18x256xf32> to vector<18x256xf32>
    %73 = vector.shape_cast %70 : vector<18x256xf32> to vector<1x18x256xf32>
    tpu.vector_store %arg4[%c0_46, %c0_47, %c0_48], %73 {strides = array<i32>} : memref<1x18x256xf32, #tpu.memory_space<vmem>>, vector<1x18x256xf32>,
    return
  }
  func.func @transform_0(%arg0: i32) -> (i32, i32) {
    %c0_i32 = arith.constant 0 : i32
    %c0_i32_0 = arith.constant 0 : i32
    %c0_i32_1 = arith.constant 0 : i32
    return %c0_i32, %c0_i32_0 : i32, i32
  }
  func.func @transform_1(%arg0: i32) -> (i32, i32, i32) {
    %c0_i32 = arith.constant 0 : i32
    %c0_i32_0 = arith.constant 0 : i32
    %c0_i32_1 = arith.constant 0 : i32
    return %arg0, %c0_i32, %c0_i32_0 : i32, i32, i32
  }
  func.func @transform_2(%arg0: i32) -> (i32, i32, i32) {
    %c0_i32 = arith.constant 0 : i32
    %c0_i32_0 = arith.constant 0 : i32
    %c0_i32_1 = arith.constant 0 : i32
    %c0_i32_2 = arith.constant 0 : i32
    return %c0_i32, %c0_i32_0, %c0_i32_1 : i32, i32, i32
  }
  func.func @transform_3(%arg0: i32) -> (i32, i32, i32) {
    %c0_i32 = arith.constant 0 : i32
    %c0_i32_0 = arith.constant 0 : i32
    %c0_i32_1 = arith.constant 0 : i32
    return %arg0, %c0_i32, %c0_i32_0 : i32, i32, i32
  }
}

module attributes {stable_mosaic.version = 11 : i64} {
  func.func @deform_matmul_bn_kernel(%arg0: i32, %arg1: i32, %arg2: memref<1x72x256xf32, #tpu.memory_space<vmem>>, %arg3: memref<8x72xf32, #tpu.memory_space<vmem>>, %arg4: memref<8x1xf32, #tpu.memory_space<vmem>>, %arg5: memref<1x8x256xf32, #tpu.memory_space<vmem>>) attributes {dimension_semantics = [#tpu.dimension_semantics<parallel>, #tpu.dimension_semantics<parallel>], iteration_bounds = array<i64: 2, 1>, scalar_prefetch = 0 : i64, scratch_operands = 0 : i64, tpu.core_type = #tpu.core_type<tc>, window_params = [{transform_indices = @transform_0, window_bounds = array<i64: 1, 72, 256>}, {pipeline_mode = #tpu.pipeline_mode<synchronous>, transform_indices = @transform_1, window_bounds = array<i64: 8, 72>}, {pipeline_mode = #tpu.pipeline_mode<synchronous>, transform_indices = @transform_2, window_bounds = array<i64: 8, 1>}, {transform_indices = @transform_3, window_bounds = array<i64: 1, 8, 256>}]} {
    %c0 = arith.constant 0 : index
    %c0_0 = arith.constant 0 : index
    %0 = vector.load %arg3[%c0, %c0_0] : memref<8x72xf32, #tpu.memory_space<vmem>>, vector<8x72xf32>
    %c0_1 = arith.constant 0 : index
    %c0_2 = arith.constant 0 : index
    %c0_3 = arith.constant 0 : index
    %1 = vector.load %arg2[%c0_1, %c0_2, %c0_3] : memref<1x72x256xf32, #tpu.memory_space<vmem>>, vector<1x72x256xf32>
    %2 = vector.shape_cast %1 : vector<1x72x256xf32> to vector<72x256xf32>
    %cst = arith.constant dense<0.000000e+00> : vector<8x256xf32>
    %3 = tpu.matmul %0, %2, %cst {dimension_numbers = #tpu.dot_dimension_numbers<[1], [0], [0], [1], [0, 0, 1, 1], [], []>} : vector<8x72xf32>, vector<72x256xf32>, vector<8x256xf32> -> vector<8x256xf32>
    %c0_4 = arith.constant 0 : index
    %c0_5 = arith.constant 0 : index
    %4 = vector.load %arg4[%c0_4, %c0_5] : memref<8x1xf32, #tpu.memory_space<vmem>>, vector<8x1xf32>
    %5 = vector.broadcast %4 : vector<8x1xf32> to vector<8x256xf32>
    %6 = arith.addf %3, %5 : vector<8x256xf32>
    %c0_6 = arith.constant 0 : index
    %c0_7 = arith.constant 0 : index
    %c0_8 = arith.constant 0 : index
    %7 = vector.load %arg5[%c0_6, %c0_7, %c0_8] : memref<1x8x256xf32, #tpu.memory_space<vmem>>, vector<1x8x256xf32>
    %8 = vector.shape_cast %7 : vector<1x8x256xf32> to vector<8x256xf32>
    %9 = vector.shape_cast %6 : vector<8x256xf32> to vector<1x8x256xf32>
    tpu.vector_store %arg5[%c0_6, %c0_7, %c0_8], %9 {strides = array<i32>} : memref<1x8x256xf32, #tpu.memory_space<vmem>>, vector<1x8x256xf32>,
    return
  }
  func.func @transform_0(%arg0: i32, %arg1: i32) -> (i32, i32, i32) {
    %c0_i32 = arith.constant 0 : i32
    %c0_i32_0 = arith.constant 0 : i32
    return %arg0, %c0_i32, %arg1 : i32, i32, i32
  }
  func.func @transform_1(%arg0: i32, %arg1: i32) -> (i32, i32) {
    %c0_i32 = arith.constant 0 : i32
    %c0_i32_0 = arith.constant 0 : i32
    %c0_i32_1 = arith.constant 0 : i32
    return %c0_i32, %c0_i32_0 : i32, i32
  }
  func.func @transform_2(%arg0: i32, %arg1: i32) -> (i32, i32) {
    %c0_i32 = arith.constant 0 : i32
    %c0_i32_0 = arith.constant 0 : i32
    %c0_i32_1 = arith.constant 0 : i32
    return %c0_i32, %c0_i32_0 : i32, i32
  }
  func.func @transform_3(%arg0: i32, %arg1: i32) -> (i32, i32, i32) {
    %c0_i32 = arith.constant 0 : i32
    %c0_i32_0 = arith.constant 0 : i32
    return %arg0, %c0_i32, %arg1 : i32, i32, i32
  }
}

</mosaic_0001>

<llo_original>
// kernel: cf_forward.3
$region0: #{cf_forward.3}
  #allocation0 [shape = 'u32[]', space=smem, size = 0x4, offset = 0x4, fixed_abs, tag = 'smem constant byte address 0x4 - core index']
  #allocation1 [shape = 'u32[144,128]{1,0:T(1,128)}', space=vmem, size = 0x12000, scoped, tag = 'internal scratch']
  %s0 = inlined_call_operand.vmem [shape: f32[2,4,256], index: 0, kind: input, shape index: {}]
  %s1 = inlined_call_operand.vmem [shape: f32[2,8,256], index: 1, kind: input, shape index: {}]
  %s2 = inlined_call_operand.vmem [shape: f32[8,4], index: 2, kind: input, shape index: {}]
  %s3 = inlined_call_operand.vmem [shape: f32[8,1], index: 3, kind: input, shape index: {}]
  %s4 = inlined_call_operand.vmem [shape: f32[2,8], index: 4, kind: input, shape index: {}]
  %s5 = inlined_call_operand.vmem [shape: f32[2,8], index: 5, kind: input, shape index: {}]
  %s6 = inlined_call_operand.vmem [shape: f32[2,1], index: 6, kind: input, shape index: {}]
  %s7 = inlined_call_operand.vmem [shape: f32[2,8,256], index: 7, kind: output, shape index: {}]
  %s8 = sld [smem:[#allocation0]]
  $region61: #{cf_forward.3} parent=0
    _
  %s10 = ssub.s32 1, %s8
  %s11 = scalar_select 0, %s10, %s8
  loop: start=0, step=1, limit=4
  $region2: #{cf_forward.3} parent=0 // loop_pre_header
    _
  $region3: #{cf_forward.3} parent=0 // loop_header
    %s13 = sphi 0, %s17
    %p14 = scmp.ge.s32.totalorder %s13, 4
    %s20 = sphi 0, %s32
    %s21 = sphi 0, %s28
    %s22 = sphi 0, %s20
    %s23 = sphi 0, %s21
    %s24 = sphi 0, %s22
    %s25 = sphi 0, %s23
    %s37 = sphi 0, %s39
    %s40 = sphi 0, %s37
    %s41 = sphi 0, %s40
    %s57 = sphi 0, %s41
    %s65 = sphi 0, %s67
    %s68 = sphi 0, %s65
    %s69 = sphi 0, %s68
    %s85 = sphi 0, %s69
    %s89 = sphi 0, %s89
    %s91 = sphi 0, %s89
    %s92 = sphi 0, %s91
    %s106 = sphi 0, %s92
    %s110 = sphi 0, %s110
    %s112 = sphi 0, %s110
    %s113 = sphi 0, %s112
    %s127 = sphi 0, %s113
    %s131 = sphi 0, %s131
    %s133 = sphi 0, %s131
    %s134 = sphi 0, %s133
    %s148 = sphi 0, %s134
    %s152 = sphi 0, %s152
    %s154 = sphi 0, %s152
    %s155 = sphi 0, %s154
    %s169 = sphi 0, %s155
    %s173 = sphi 0, %s173
    %s175 = sphi 0, %s173
    %s176 = sphi 0, %s175
    %s190 = sphi 0, %s176
    %s198 = sphi 0, %s200
    %s201 = sphi 0, %s198
    %s202 = sphi 0, %s201
    %s218 = sphi 0, %s202
  $region4: #{cf_forward.3} parent=0 // loop_header_branch
    %16 = sbr.rel (%p14) target = $region8
  $region5: #{cf_forward.3} parent=0 // loop_body
    %s18 = ssub.s32 %s13, 1
    %s19 = ssub.s32 %s13, 2
    %s26 = sadd.s32 1, %s21
    %p27 = scmp.ge.s32.totalorder %s26, 1
    %s28 = scalar_select %p27, 0, %s26
    %s29 = sadd.s32 1, %s20
    %s30 = scalar_select %p27, %s29, %s20
    %p31 = scmp.ge.s32.totalorder %s30, 2
    %s32 = scalar_select %p31, 0, %s30
    %s33 = ssub.s32 %s20, %s32
    %s34 = ssub.s32 %s21, %s28
    %s35 = sor.u32 %s33, %s34
    %p36 = scmp.eq.s32.totalorder %s35, 0
    %s38 = sadd.s32 %s37, 1
    %s39 = scalar_select %p36, %s37, %s38
    %p42 = pneg %p36
    %p43 = scmp.eq.s32.totalorder %s13, 1
    %p44 = por %p42, %p43
    %p45 = scmp.ne.s32.totalorder %s37, %s40
    %p46 = scmp.eq.s32.totalorder %s13, 0
    %p47 = por %p45, %p46
    %p48 = scmp.ne.s32.totalorder %s37, %s40
    %p49 = scmp.eq.s32.totalorder %s18, 1
    %p50 = por %p48, %p49
    %p51 = scmp.ne.s32.totalorder %s40, %s41
    %p52 = scmp.eq.s32.totalorder %s18, 0
    %p53 = por %p51, %p52
    %p54 = scmp.ne.s32.totalorder %s40, %s41
    %p55 = scmp.eq.s32.totalorder %s19, 1
    %p56 = por %p54, %p55
    %p58 = scmp.ne.s32.totalorder %s41, %s57
    %p59 = scmp.eq.s32.totalorder %s19, 0
    %p60 = por %p58, %p59
    %s61 = ssub.s32 %s20, %s32
    %s62 = ssub.s32 %s21, %s28
    %s63 = sor.u32 %s61, %s62
    %p64 = scmp.eq.s32.totalorder %s63, 0
    %s66 = sadd.s32 %s65, 1
    %s67 = scalar_select %p64, %s65, %s66
    %p70 = pneg %p64
    %p71 = scmp.eq.s32.totalorder %s13, 1
    %p72 = por %p70, %p71
    %p73 = scmp.ne.s32.totalorder %s65, %s68
    %p74 = scmp.eq.s32.totalorder %s13, 0
    %p75 = por %p73, %p74
    %p76 = scmp.ne.s32.totalorder %s65, %s68
    %p77 = scmp.eq.s32.totalorder %s18, 1
    %p78 = por %p76, %p77
    %p79 = scmp.ne.s32.totalorder %s68, %s69
    %p80 = scmp.eq.s32.totalorder %s18, 0
    %p81 = por %p79, %p80
    %p82 = scmp.ne.s32.totalorder %s68, %s69
    %p83 = scmp.eq.s32.totalorder %s19, 1
    %p84 = por %p82, %p83
    %p86 = scmp.ne.s32.totalorder %s69, %s85
    %p87 = scmp.eq.s32.totalorder %s19, 0
    %p88 = por %p86, %p87
    %s90 = sadd.s32 %s89, 1
    %p93 = scmp.eq.s32.totalorder %s13, 1
    %p94 = scmp.ne.s32.totalorder %s89, %s91
    %p95 = scmp.eq.s32.totalorder %s13, 0
    %p96 = por %p94, %p95
    %p97 = scmp.ne.s32.totalorder %s89, %s91
    %p98 = scmp.eq.s32.totalorder %s18, 1
    %p99 = por %p97, %p98
    %p100 = scmp.ne.s32.totalorder %s91, %s92
    %p101 = scmp.eq.s32.totalorder %s18, 0
    %p102 = por %p100, %p101
    %p103 = scmp.ne.s32.totalorder %s91, %s92
    %p104 = scmp.eq.s32.totalorder %s19, 1
    %p105 = por %p103, %p104
    %p107 = scmp.ne.s32.totalorder %s92, %s106
    %p108 = scmp.eq.s32.totalorder %s19, 0
    %p109 = por %p107, %p108
    %s111 = sadd.s32 %s110, 1
    %p114 = scmp.eq.s32.totalorder %s13, 1
    %p115 = scmp.ne.s32.totalorder %s110, %s112
    %p116 = scmp.eq.s32.totalorder %s13, 0
    %p117 = por %p115, %p116
    %p118 = scmp.ne.s32.totalorder %s110, %s112
    %p119 = scmp.eq.s32.totalorder %s18, 1
    %p120 = por %p118, %p119
    %p121 = scmp.ne.s32.totalorder %s112, %s113
    %p122 = scmp.eq.s32.totalorder %s18, 0
    %p123 = por %p121, %p122
    %p124 = scmp.ne.s32.totalorder %s112, %s113
    %p125 = scmp.eq.s32.totalorder %s19, 1
    %p126 = por %p124, %p125
    %p128 = scmp.ne.s32.totalorder %s113, %s127
    %p129 = scmp.eq.s32.totalorder %s19, 0
    %p130 = por %p128, %p129
    %s132 = sadd.s32 %s131, 1
    %p135 = scmp.eq.s32.totalorder %s13, 1
    %p136 = scmp.ne.s32.totalorder %s131, %s133
    %p137 = scmp.eq.s32.totalorder %s13, 0
    %p138 = por %p136, %p137
    %p139 = scmp.ne.s32.totalorder %s131, %s133
    %p140 = scmp.eq.s32.totalorder %s18, 1
    %p141 = por %p139, %p140
    %p142 = scmp.ne.s32.totalorder %s133, %s134
    %p143 = scmp.eq.s32.totalorder %s18, 0
    %p144 = por %p142, %p143
    %p145 = scmp.ne.s32.totalorder %s133, %s134
    %p146 = scmp.eq.s32.totalorder %s19, 1
    %p147 = por %p145, %p146
    %p149 = scmp.ne.s32.totalorder %s134, %s148
    %p150 = scmp.eq.s32.totalorder %s19, 0
    %p151 = por %p149, %p150
    %s153 = sadd.s32 %s152, 1
    %p156 = scmp.eq.s32.totalorder %s13, 1
    %p157 = scmp.ne.s32.totalorder %s152, %s154
    %p158 = scmp.eq.s32.totalorder %s13, 0
    %p159 = por %p157, %p158
    %p160 = scmp.ne.s32.totalorder %s152, %s154
    %p161 = scmp.eq.s32.totalorder %s18, 1
    %p162 = por %p160, %p161
    %p163 = scmp.ne.s32.totalorder %s154, %s155
    %p164 = scmp.eq.s32.totalorder %s18, 0
    %p165 = por %p163, %p164
    %p166 = scmp.ne.s32.totalorder %s154, %s155
    %p167 = scmp.eq.s32.totalorder %s19, 1
    %p168 = por %p166, %p167
    %p170 = scmp.ne.s32.totalorder %s155, %s169
    %p171 = scmp.eq.s32.totalorder %s19, 0
    %p172 = por %p170, %p171
    %s174 = sadd.s32 %s173, 1
    %p177 = scmp.eq.s32.totalorder %s13, 1
    %p178 = scmp.ne.s32.totalorder %s173, %s175
    %p179 = scmp.eq.s32.totalorder %s13, 0
    %p180 = por %p178, %p179
    %p181 = scmp.ne.s32.totalorder %s173, %s175
    %p182 = scmp.eq.s32.totalorder %s18, 1
    %p183 = por %p181, %p182
    %p184 = scmp.ne.s32.totalorder %s175, %s176
    %p185 = scmp.eq.s32.totalorder %s18, 0
    %p186 = por %p184, %p185
    %p187 = scmp.ne.s32.totalorder %s175, %s176
    %p188 = scmp.eq.s32.totalorder %s19, 1
    %p189 = por %p187, %p188
    %p191 = scmp.ne.s32.totalorder %s176, %s190
    %p192 = scmp.eq.s32.totalorder %s19, 0
    %p193 = por %p191, %p192
    %s194 = ssub.s32 %s20, %s32
    %s195 = ssub.s32 %s21, %s28
    %s196 = sor.u32 %s194, %s195
    %p197 = scmp.eq.s32.totalorder %s196, 0
    %s199 = sadd.s32 %s198, 1
    %s200 = scalar_select %p197, %s198, %s199
    %p203 = pneg %p197
    %p204 = scmp.eq.s32.totalorder %s13, 1
    %p205 = por %p203, %p204
    %p206 = scmp.ne.s32.totalorder %s198, %s201
    %p207 = scmp.eq.s32.totalorder %s13, 0
    %p208 = por %p206, %p207
    %p209 = scmp.ne.s32.totalorder %s198, %s201
    %p210 = scmp.eq.s32.totalorder %s18, 1
    %p211 = por %p209, %p210
    %p212 = scmp.ne.s32.totalorder %s201, %s202
    %p213 = scmp.eq.s32.totalorder %s18, 0
    %p214 = por %p212, %p213
    %p215 = scmp.ne.s32.totalorder %s201, %s202
    %p216 = scmp.eq.s32.totalorder %s19, 1
    %p217 = por %p215, %p216
    %p219 = scmp.ne.s32.totalorder %s202, %s218
    %p220 = scmp.eq.s32.totalorder %s19, 0
    %p221 = por %p219, %p220
    %p222 = scmp.le.s32.totalorder 1, %s13
    %p223 = scmp.lt.s32.totalorder %s13, 3
    %p224 = pnand %p222, %p223
    %p225 = pneg %p224
    // Predicated region
    $region9: #{cf_forward.3} parent=5 // pred_check
      _
    $region10: #{cf_forward.3} parent=5 // pred_check_branch
      %227 = sbr.rel (%p224) target = $region12
    $region11: #{cf_forward.3} parent=5 // pred_region
      %s228 = ssub.s32 %s13, 1
      // Predicated region
      $region13: #{cf_forward.3} parent=11 // pred_check
        %p229 = pneg %p102
      $region14: #{cf_forward.3} parent=11 // pred_check_branch
        %231 = sbr.rel (%p229) target = $region16
      $region15: #{cf_forward.3} parent=11 // pred_region
        _
      $region16: #{cf_forward.3} parent=11 // pred_fallthru
        _
      // Predicated region
      $region17: #{cf_forward.3} parent=11 // pred_check
        %p232 = pneg %p123
      $region18: #{cf_forward.3} parent=11 // pred_check_branch
        %234 = sbr.rel (%p232) target = $region20
      $region19: #{cf_forward.3} parent=11 // pred_region
        _
      $region20: #{cf_forward.3} parent=11 // pred_fallthru
        _
      // Predicated region
      $region21: #{cf_forward.3} parent=11 // pred_check
        %p235 = pneg %p144
      $region22: #{cf_forward.3} parent=11 // pred_check_branch
        %237 = sbr.rel (%p235) target = $region24
      $region23: #{cf_forward.3} parent=11 // pred_region
        _
      $region24: #{cf_forward.3} parent=11 // pred_fallthru
        _
      // Predicated region
      $region25: #{cf_forward.3} parent=11 // pred_check
        %p238 = pneg %p165
      $region26: #{cf_forward.3} parent=11 // pred_check_branch
        %240 = sbr.rel (%p238) target = $region28
      $region27: #{cf_forward.3} parent=11 // pred_region
        _
      $region28: #{cf_forward.3} parent=11 // pred_fallthru
        _
      // Predicated region
      $region29: #{cf_forward.3} parent=11 // pred_check
        %p241 = pneg %p186
      $region30: #{cf_forward.3} parent=11 // pred_check_branch
        %243 = sbr.rel (%p241) target = $region32
      $region31: #{cf_forward.3} parent=11 // pred_region
        _
      $region32: #{cf_forward.3} parent=11 // pred_fallthru
        _
    $region12: #{cf_forward.3} parent=5 // pred_fallthru
      _
    %p244 = scmp.lt.s32.totalorder %s13, 2
    // Predicated region
    $region33: #{cf_forward.3} parent=5 // pred_check
      %p245 = pneg %p244
    $region34: #{cf_forward.3} parent=5 // pred_check_branch
      %247 = sbr.rel (%p245) target = $region36
    $region35: #{cf_forward.3} parent=5 // pred_region
      // Predicated region
      $region37: #{cf_forward.3} parent=35 // pred_check
        %p248 = pneg %p47
      $region38: #{cf_forward.3} parent=35 // pred_check_branch
        %250 = sbr.rel (%p248) target = $region40
      $region39: #{cf_forward.3} parent=35 // pred_region
        %s251 = smul.u32 2, %s21
        %p252 = scmp.lt.s32.totalorder %s20, 1
        %s253 = scalar_select %p252, %s20, 1
        %p254 = scmp.lt.s32.totalorder %s251, 1
        %s255 = scalar_select %p254, %s251, 1
        %s256 = smul.addr %s253, 2
        %s257 = sadd.s32 %s255, %s256
        %s258 = smul.addr %s257, 4
        %s259 = scalar_lea.vmem %s0, %s258
        %s260 = smul.u32 2, %s21
      $region40: #{cf_forward.3} parent=35 // pred_fallthru
        _
      // Predicated region
      $region41: #{cf_forward.3} parent=35 // pred_check
        %p261 = pneg %p75
      $region42: #{cf_forward.3} parent=35 // pred_check_branch
        %263 = sbr.rel (%p261) target = $region44
      $region43: #{cf_forward.3} parent=35 // pred_region
        %s264 = smul.u32 2, %s21
        %p265 = scmp.lt.s32.totalorder %s20, 1
        %s266 = scalar_select %p265, %s20, 1
        %p267 = scmp.lt.s32.totalorder %s264, 1
        %s268 = scalar_select %p267, %s264, 1
        %s269 = smul.addr %s266, 2
        %s270 = sadd.s32 %s268, %s269
        %s271 = smul.addr %s270, 8
        %s272 = scalar_lea.vmem %s1, %s271
        %s273 = smul.u32 2, %s21
      $region44: #{cf_forward.3} parent=35 // pred_fallthru
        _
    $region36: #{cf_forward.3} parent=5 // pred_fallthru
      _
    %p274 = scmp.le.s32.totalorder 1, %s13
    %p275 = scmp.lt.s32.totalorder %s13, 3
    %p276 = pnand %p274, %p275
    %p277 = pneg %p276
    // Predicated region
    $region45: #{cf_forward.3} parent=5 // pred_check
      _
    $region46: #{cf_forward.3} parent=5 // pred_check_branch
      %279 = sbr.rel (%p276) target = $region48
    $region47: #{cf_forward.3} parent=5 // pred_region
      %s280 = ssub.s32 %s13, 1
      %s281 = smul.u32 2, %s23
      %p282 = scmp.lt.s32.totalorder %s22, 1
      %s283 = scalar_select %p282, %s22, 1
      %p284 = scmp.lt.s32.totalorder %s281, 1
      %s285 = scalar_select %p284, %s281, 1
      %s286 = smul.addr %s283, 2
      %s287 = sadd.s32 %s285, %s286
      %s288 = smul.addr %s287, 4
      %s289 = scalar_lea.vmem %s0, %s288
      %p290 = pneg %p53
      %p291 = pneg %p50
      %s292 = smul.u32 2, %s23
      %p293 = scmp.lt.s32.totalorder %s22, 1
      %s294 = scalar_select %p293, %s22, 1
      %p295 = scmp.lt.s32.totalorder %s292, 1
      %s296 = scalar_select %p295, %s292, 1
      %s297 = smul.addr %s294, 2
      %s298 = sadd.s32 %s296, %s297
      %s299 = smul.addr %s298, 8
      %s300 = scalar_lea.vmem %s1, %s299
      %p301 = pneg %p81
      %p302 = pneg %p78
      %p303 = pneg %p102
      %p304 = pneg %p99
      %p305 = pneg %p123
      %p306 = pneg %p120
      %p307 = pneg %p144
      %p308 = pneg %p141
      %p309 = pneg %p165
      %p310 = pneg %p162
      %p311 = pneg %p186
      %p312 = pneg %p183
      %p313 = pneg %p214
      %p314 = pneg %p211
      %s315 = smul.u32 2, %s23
      %p316 = scmp.lt.s32.totalorder %s22, 1
      %s317 = scalar_select %p316, %s22, 1
      %p318 = scmp.lt.s32.totalorder %s315, 1
      %s319 = scalar_select %p318, %s315, 1
      %s320 = smul.addr %s317, 2
      %s321 = sadd.s32 %s319, %s320
      %s322 = smul.addr %s321, 8
      %s323 = scalar_lea.vmem %s7, %s322
      %s324 = smul.u32 2, %s23
      %p325 = scmp.lt.s32.totalorder %s22, 1
      %s326 = scalar_select %p325, %s22, 1
      %p327 = scmp.lt.s32.totalorder %s324, 1
      %s328 = scalar_select %p327, %s324, 1
      %s329 = smul.addr %s326, 2
      %s330 = sadd.s32 %s328, %s329
      %s331 = smul.addr %s330, 4
      %s332 = scalar_lea.vmem %s0, %s331
      %s333 = smul.u32 2, %s23
      %s334 = smul.u32 2, %s23
      %p335 = scmp.lt.s32.totalorder %s22, 1
      %s336 = scalar_select %p335, %s22, 1
      %p337 = scmp.lt.s32.totalorder %s334, 1
      %s338 = scalar_select %p337, %s334, 1
      %s339 = smul.addr %s336, 2
      %s340 = sadd.s32 %s338, %s339
      %s341 = smul.addr %s340, 8
      %s342 = scalar_lea.vmem %s1, %s341
      %s343 = smul.u32 2, %s23
      %s344 = smul.u32 2, %s23
      %p345 = scmp.lt.s32.totalorder %s22, 1
      %s346 = scalar_select %p345, %s22, 1
      %p347 = scmp.lt.s32.totalorder %s344, 1
      %s348 = scalar_select %p347, %s344, 1
      %s349 = smul.addr %s346, 2
      %s350 = sadd.s32 %s348, %s349
      %s351 = smul.addr %s350, 8
      %s352 = scalar_lea.vmem %s7, %s351
      %s353 = smul.u32 2, %s23
      %v354 = vld [vmem:[%s332] sm:$0xff]
      %v355 = vld [vmem:[%s342] sm:$0xff]
      %v356 = vld [vmem:[%s342 + $0x8] sm:$0xff]
      %v357 = vld [vmem:[%s2] sm:$0xff]
      %v358 = vld [vmem:[%s3] sm:$0xff]
      %360 = vset.pattern.permute.xlu0 0
      %361 = vperm.xlu0 %360, %v358
      %v362 = vpop.permute.xlu0 %361
      %v365 = vcombine.high %v354, %v354
      %vm366 = vcmask 31744
      %v368 = vsel %vm366, %v357, 0
      %vm370 = vcmask 1043456
      %v371 = vsel %vm370, %v354, 0
      %v373 = vsel %vm370, %v365, 0
      %375 = vmatprep.subr.mxu0 %v373
      %376 = vmatpush1.msra.mxu0 %v371
      %377 = vmatprep.subr.mxu0 0.0
      %378 = vmatpush1.msra.mxu0 0.0
      %379 = vmatprep.subr.mxu0 0.0
      %380 = vmatpush1.msra.mxu0 0.0
      %381 = vmatprep.subr.mxu0 0.0
      %382 = vmatpush1.msra.mxu0 0.0
      %383 = vmatprep.subr.mxu0 0.0
      %384 = vmatpush1.msra.mxu0 0.0
      %385 = vmatprep.subr.mxu0 0.0
      %386 = vmatpush1.msra.mxu0 0.0
      %387 = vmatprep.subr.mxu0 0.0
      %388 = vmatpush1.msra.mxu0 0.0
      %389 = vmatprep.subr.mxu0 0.0
      %390 = vmatpush1.msra.mxu0 0.0
      %391 = vmatprep.subr.mxu0 0.0
      %392 = vmatpush1.msra.mxu0 0.0
      %393 = vmatprep.subr.mxu0 0.0
      %394 = vmatpush1.msra.mxu0 0.0
      %395 = vmatprep.subr.mxu0 0.0
      %396 = vmatpush1.msra.mxu0 0.0
      %397 = vmatprep.subr.mxu0 0.0
      %398 = vmatpush1.msra.mxu0 0.0
      %399 = vmatprep.subr.mxu0 0.0
      %400 = vmatpush1.msra.mxu0 0.0
      %401 = vmatprep.subr.mxu0 0.0
      %402 = vmatpush1.msra.mxu0 0.0
      %403 = vmatprep.subr.mxu0 0.0
      %404 = vmatpush1.msra.mxu0 0.0
      %405 = vmatprep.subr.mxu0 0.0
      %406 = vmatpush1.msra.mxu0 0.0
      %407 = vmatprep.subr.mxu0 0.0
      %408 = vmatpush1.msra.mxu0 0.0
      %409 = vmatprep.subr.mxu0 0.0
      %410 = vmatpush1.msra.mxu0 0.0
      %411 = vmatprep.subr.mxu0 0.0
      %412 = vmatpush1.msra.mxu0 0.0
      %413 = vmatprep.subr.mxu0 0.0
      %414 = vmatpush1.msra.mxu0 0.0
      %415 = vmatprep.subr.mxu0 0.0
      %416 = vmatpush1.msra.mxu0 0.0
      %417 = vmatprep.subr.mxu0 0.0
      %418 = vmatpush1.msra.mxu0 0.0
      %419 = vmatprep.subr.mxu0 0.0
      %420 = vmatpush1.msra.mxu0 0.0
      %421 = vmatprep.subr.mxu0 0.0
      %422 = vmatpush1.msra.mxu0 0.0
      %423 = vmatprep.subr.mxu0 0.0
      %424 = vmatpush1.msra.mxu0 0.0
      %425 = vmatprep.subr.mxu0 0.0
      %426 = vmatpush1.msra.mxu0 0.0
      %427 = vmatprep.subr.mxu0 0.0
      %428 = vmatpush1.msra.mxu0 0.0
      %429 = vmatprep.subr.mxu0 0.0
      %430 = vmatpush1.msra.mxu0 0.0
      %431 = vmatprep.subr.mxu0 0.0
      %432 = vmatpush1.msra.mxu0 0.0
      %433 = vmatprep.subr.mxu0 0.0
      %434 = vmatpush1.msra.mxu0 0.0
      %435 = vmatprep.subr.mxu0 0.0
      %436 = vmatpush1.msra.mxu0 0.0
      %437 = vmatprep.subr.mxu0 0.0
      %438 = vmatpush1.msra.mxu0 0.0
      %439 = vmatprep.mubr.f32.mxu0 0.0
      %440 = vmatmul.mubr.f32.gmra.mrb[0].mxu0 %v368
      %v441 = vpop.f32.mrb[0].mxu0
      %v442 = vadd.f32 %v362, %v441
      %v443 = vpop.f32.mrb[0].mxu0
      %v444 = vadd.f32 %v362, %v443
      %445 = vdwg.mxu0
      %v446 = vld [vmem:[%s4] sm:$0x3]
      %v447 = vld [vmem:[%s5] sm:$0x3]
      %vm448 = vcmask 64512
      %v450 = vsel %vm448, %v447, 0
      %452 = vmatprep.subr.mxu0 %v356
      %453 = vmatpush1.msra.mxu0 %v355
      %454 = vmatprep.subr.mxu0 0.0
      %455 = vmatpush1.msra.mxu0 0.0
      %456 = vmatprep.subr.mxu0 0.0
      %457 = vmatpush1.msra.mxu0 0.0
      %458 = vmatprep.subr.mxu0 0.0
      %459 = vmatpush1.msra.mxu0 0.0
      %460 = vmatprep.subr.mxu0 0.0
      %461 = vmatpush1.msra.mxu0 0.0
      %462 = vmatprep.subr.mxu0 0.0
      %463 = vmatpush1.msra.mxu0 0.0
      %464 = vmatprep.subr.mxu0 0.0
      %465 = vmatpush1.msra.mxu0 0.0
      %466 = vmatprep.subr.mxu0 0.0
      %467 = vmatpush1.msra.mxu0 0.0
      %468 = vmatprep.subr.mxu0 0.0
      %469 = vmatpush1.msra.mxu0 0.0
      %470 = vmatprep.subr.mxu0 0.0
      %471 = vmatpush1.msra.mxu0 0.0
      %472 = vmatprep.subr.mxu0 0.0
      %473 = vmatpush1.msra.mxu0 0.0
      %474 = vmatprep.subr.mxu0 0.0
      %475 = vmatpush1.msra.mxu0 0.0
      %476 = vmatprep.subr.mxu0 0.0
      %477 = vmatpush1.msra.mxu0 0.0
      %478 = vmatprep.subr.mxu0 0.0
      %479 = vmatpush1.msra.mxu0 0.0
      %480 = vmatprep.subr.mxu0 0.0
      %481 = vmatpush1.msra.mxu0 0.0
      %482 = vmatprep.subr.mxu0 0.0
      %483 = vmatpush1.msra.mxu0 0.0
      %484 = vmatprep.subr.mxu0 0.0
      %485 = vmatpush1.msra.mxu0 0.0
      %486 = vmatprep.subr.mxu0 0.0
      %487 = vmatpush1.msra.mxu0 0.0
      %488 = vmatprep.subr.mxu0 0.0
      %489 = vmatpush1.msra.mxu0 0.0
      %490 = vmatprep.subr.mxu0 0.0
      %491 = vmatpush1.msra.mxu0 0.0
      %492 = vmatprep.subr.mxu0 0.0
      %493 = vmatpush1.msra.mxu0 0.0
      %494 = vmatprep.subr.mxu0 0.0
      %495 = vmatpush1.msra.mxu0 0.0
      %496 = vmatprep.subr.mxu0 0.0
      %497 = vmatpush1.msra.mxu0 0.0
      %498 = vmatprep.subr.mxu0 0.0
      %499 = vmatpush1.msra.mxu0 0.0
      %500 = vmatprep.subr.mxu0 0.0
      %501 = vmatpush1.msra.mxu0 0.0
      %502 = vmatprep.subr.mxu0 0.0
      %503 = vmatpush1.msra.mxu0 0.0
      %504 = vmatprep.subr.mxu0 0.0
      %505 = vmatpush1.msra.mxu0 0.0
      %506 = vmatprep.subr.mxu0 0.0
      %507 = vmatpush1.msra.mxu0 0.0
      %508 = vmatprep.subr.mxu0 0.0
      %509 = vmatpush1.msra.mxu0 0.0
      %510 = vmatprep.subr.mxu0 0.0
      %511 = vmatpush1.msra.mxu0 0.0
      %512 = vmatprep.subr.mxu0 0.0
      %513 = vmatpush1.msra.mxu0 0.0
      %514 = vmatprep.subr.mxu0 0.0
      %515 = vmatpush1.msra.mxu0 0.0
      %516 = vmatprep.mubr.f32.mxu0 0.0
      %517 = vmatmul.mubr.f32.gmra.mrb[0].mxu0 %v450
      %v518 = vpop.f32.mrb[0].mxu0
      %v519 = vadd.f32 0.0, %v518
      %v520 = vpop.f32.mrb[0].mxu0
      %v521 = vadd.f32 0.0, %v520
      %522 = vdwg.mxu0
      %v524 = vsel %vm448, %v446, 0
      %526 = vmatprep.subr.mxu0 %v444
      %527 = vmatpush1.msra.mxu0 %v442
      %528 = vmatprep.subr.mxu0 0.0
      %529 = vmatpush1.msra.mxu0 0.0
      %530 = vmatprep.subr.mxu0 0.0
      %531 = vmatpush1.msra.mxu0 0.0
      %532 = vmatprep.subr.mxu0 0.0
      %533 = vmatpush1.msra.mxu0 0.0
      %534 = vmatprep.subr.mxu0 0.0
      %535 = vmatpush1.msra.mxu0 0.0
      %536 = vmatprep.subr.mxu0 0.0
      %537 = vmatpush1.msra.mxu0 0.0
      %538 = vmatprep.subr.mxu0 0.0
      %539 = vmatpush1.msra.mxu0 0.0
      %540 = vmatprep.subr.mxu0 0.0
      %541 = vmatpush1.msra.mxu0 0.0
      %542 = vmatprep.subr.mxu0 0.0
      %543 = vmatpush1.msra.mxu0 0.0
      %544 = vmatprep.subr.mxu0 0.0
      %545 = vmatpush1.msra.mxu0 0.0
      %546 = vmatprep.subr.mxu0 0.0
      %547 = vmatpush1.msra.mxu0 0.0
      %548 = vmatprep.subr.mxu0 0.0
      %549 = vmatpush1.msra.mxu0 0.0
      %550 = vmatprep.subr.mxu0 0.0
      %551 = vmatpush1.msra.mxu0 0.0
      %552 = vmatprep.subr.mxu0 0.0
      %553 = vmatpush1.msra.mxu0 0.0
      %554 = vmatprep.subr.mxu0 0.0
      %555 = vmatpush1.msra.mxu0 0.0
      %556 = vmatprep.subr.mxu0 0.0
      %557 = vmatpush1.msra.mxu0 0.0
      %558 = vmatprep.subr.mxu0 0.0
      %559 = vmatpush1.msra.mxu0 0.0
      %560 = vmatprep.subr.mxu0 0.0
      %561 = vmatpush1.msra.mxu0 0.0
      %562 = vmatprep.subr.mxu0 0.0
      %563 = vmatpush1.msra.mxu0 0.0
      %564 = vmatprep.subr.mxu0 0.0
      %565 = vmatpush1.msra.mxu0 0.0
      %566 = vmatprep.subr.mxu0 0.0
      %567 = vmatpush1.msra.mxu0 0.0
      %568 = vmatprep.subr.mxu0 0.0
      %569 = vmatpush1.msra.mxu0 0.0
      %570 = vmatprep.subr.mxu0 0.0
      %571 = vmatpush1.msra.mxu0 0.0
      %572 = vmatprep.subr.mxu0 0.0
      %573 = vmatpush1.msra.mxu0 0.0
      %574 = vmatprep.subr.mxu0 0.0
      %575 = vmatpush1.msra.mxu0 0.0
      %576 = vmatprep.subr.mxu0 0.0
      %577 = vmatpush1.msra.mxu0 0.0
      %578 = vmatprep.subr.mxu0 0.0
      %579 = vmatpush1.msra.mxu0 0.0
      %580 = vmatprep.subr.mxu0 0.0
      %581 = vmatpush1.msra.mxu0 0.0
      %582 = vmatprep.subr.mxu0 0.0
      %583 = vmatpush1.msra.mxu0 0.0
      %584 = vmatprep.subr.mxu0 0.0
      %585 = vmatpush1.msra.mxu0 0.0
      %586 = vmatprep.subr.mxu0 0.0
      %587 = vmatpush1.msra.mxu0 0.0
      %588 = vmatprep.subr.mxu0 0.0
      %589 = vmatpush1.msra.mxu0 0.0
      %590 = vmatprep.mubr.f32.mxu0 0.0
      %591 = vmatmul.mubr.f32.gmra.mrb[0].mxu0 %v524
      %v592 = vpop.f32.mrb[0].mxu0
      %v593 = vadd.f32 %v519, %v592
      %v594 = vpop.f32.mrb[0].mxu0
      %v595 = vadd.f32 %v521, %v594
      %596 = vdwg.mxu0
      %v597 = vld [vmem:[%s6] sm:$0x3]
      %599 = vset.pattern.permute.xlu0 0
      %600 = vperm.xlu0 %599, %v597
      %v601 = vpop.permute.xlu0 %600
      %v603 = vadd.f32 %v593, %v601
      %v604 = vadd.f32 %v595, %v601
      %v605 = vxor.u32 %v603, 2147483648
      %v606 = vxor.u32 %v604, 2147483648
      %v607 = vmul.f32 %v605, 1.442695
      %v608 = vpow.pop %v607
      %v609 = vmul.f32 %v606, 1.442695
      %v610 = vpow.pop %v609
      %v611 = vadd.f32 %v608, 1.0
      %v612 = vadd.f32 %v610, 1.0
      %v613 = vrcp.pop %v611
      %v614 = vmul.f32 1.0, %v613
      %v615 = vrcp.pop %v612
      %v616 = vmul.f32 1.0, %v615
      %v617 = vlaneseq
      %v618 = vshrl.u32 %v617, 7
      %v619 = vsub.s32 0, %v618
      %v620 = vrot.slane %v614, %v619
      %v621 = vlaneseq
      %v622 = vshrl.u32 %v621, 7
      %v623 = vsub.s32 0, %v622
      %v624 = vrot.slane %v616, %v623
      %v625 = vmul.f32 %v442, %v620
      %v626 = vmul.f32 %v444, %v624
      %v627 = vlaneseq
      %v628 = vshrl.u32 %v627, 7
      %v629 = vsub.s32 1, %v628
      %v630 = vrot.slane %v614, %v629
      %v631 = vlaneseq
      %v632 = vshrl.u32 %v631, 7
      %v633 = vsub.s32 1, %v632
      %v634 = vrot.slane %v616, %v633
      %v635 = vmul.f32 %v355, %v630
      %v636 = vmul.f32 %v356, %v634
      %v637 = vadd.f32 %v625, %v635
      %v638 = vadd.f32 %v626, %v636
      %639 = vst [vmem:[%s352] sm:$0xff] %v637
      %640 = vst [vmem:[%s352 + $0x8] sm:$0xff] %v638
      %s641 = smul.u32 2, %s23
      %p642 = scmp.lt.s32.totalorder %s22, 1
      %s643 = scalar_select %p642, %s22, 1
      %p644 = scmp.lt.s32.totalorder %s641, 1
      %s645 = scalar_select %p644, %s641, 1
      %s646 = smul.addr %s643, 2
      %s647 = sadd.s32 %s645, %s646
      %s648 = smul.addr %s647, 8
      %s649 = scalar_lea.vmem %s7, %s648
      // Predicated region
      $region49: #{cf_forward.3} parent=47 // pred_check
        %p650 = pneg %p211
      $region50: #{cf_forward.3} parent=47 // pred_check_branch
        %652 = sbr.rel (%p650) target = $region52
      $region51: #{cf_forward.3} parent=47 // pred_region
        %s653 = smul.u32 2, %s23
      $region52: #{cf_forward.3} parent=47 // pred_fallthru
        _
    $region48: #{cf_forward.3} parent=5 // pred_fallthru
      _
    %p654 = scmp.le.s32.totalorder 2, %s13
    // Predicated region
    $region53: #{cf_forward.3} parent=5 // pred_check
      %p655 = pneg %p654
    $region54: #{cf_forward.3} parent=5 // pred_check_branch
      %657 = sbr.rel (%p655) target = $region56
    $region55: #{cf_forward.3} parent=5 // pred_region
      %s658 = ssub.s32 %s13, 2
      // Predicated region
      $region57: #{cf_forward.3} parent=55 // pred_check
        %p659 = pneg %p217
      $region58: #{cf_forward.3} parent=55 // pred_check_branch
        %661 = sbr.rel (%p659) target = $region60
      $region59: #{cf_forward.3} parent=55 // pred_region
        %s662 = smul.u32 2, %s25
        %p663 = scmp.lt.s32.totalorder %s24, 1
        %s664 = scalar_select %p663, %s24, 1
        %p665 = scmp.lt.s32.totalorder %s662, 1
        %s666 = scalar_select %p665, %s662, 1
        %s667 = smul.addr %s664, 2
        %s668 = sadd.s32 %s666, %s667
        %s669 = smul.addr %s668, 8
        %s670 = scalar_lea.vmem %s7, %s669
      $region60: #{cf_forward.3} parent=55 // pred_fallthru
        _
    $region56: #{cf_forward.3} parent=5 // pred_fallthru
      _
  $region6: #{cf_forward.3} parent=0 // loop_footer
    %s17 = sadd.s32 1, %s13
  $region7: #{cf_forward.3} parent=0 // loop_footer_branch
    %12 = sbr.rel target = $region3
  $region8: #{cf_forward.3} parent=0 // loop_exit
    _

// kernel: cf_forward.4
$region0: #{cf_forward.4}
  #allocation0 [shape = 'u32[]', space=smem, size = 0x4, offset = 0x4, fixed_abs, tag = 'smem constant byte address 0x4 - core index']
  #allocation1 [shape = 'u32[144,128]{1,0:T(1,128)}', space=vmem, size = 0x12000, scoped, tag = 'internal scratch']
  %s0 = inlined_call_operand.vmem [shape: f32[9,256], index: 0, kind: input, shape index: {}]
  %s1 = inlined_call_operand.vmem [shape: f32[2,8,256], index: 1, kind: input, shape index: {}]
  %s2 = inlined_call_operand.vmem [shape: f32[9,18,8], index: 2, kind: input, shape index: {}]
  %s3 = inlined_call_operand.vmem [shape: f32[2,18,256], index: 3, kind: output, shape index: {}]
  %s4 = sld [smem:[#allocation0]]
  $region45: #{cf_forward.4} parent=0
    _
  %s6 = ssub.s32 1, %s4
  %s7 = scalar_select 0, %s6, %s4
  loop: start=0, step=1, limit=4
  $region2: #{cf_forward.4} parent=0 // loop_pre_header
    _
  $region3: #{cf_forward.4} parent=0 // loop_header
    %s9 = sphi 0, %s13
    %p10 = scmp.ge.s32.totalorder %s9, 4
    %s17 = sphi 0, %s17
    %s19 = sphi 0, %s17
    %s20 = sphi 0, %s19
    %s34 = sphi 0, %s20
    %s40 = sphi 0, %s42
    %s43 = sphi 0, %s40
    %s44 = sphi 0, %s43
    %s60 = sphi 0, %s44
    %s64 = sphi 0, %s64
    %s66 = sphi 0, %s64
    %s67 = sphi 0, %s66
    %s81 = sphi 0, %s67
    %s87 = sphi 0, %s89
    %s90 = sphi 0, %s87
    %s91 = sphi 0, %s90
    %s107 = sphi 0, %s91
  $region4: #{cf_forward.4} parent=0 // loop_header_branch
    %12 = sbr.rel (%p10) target = $region8
  $region5: #{cf_forward.4} parent=0 // loop_body
    %s14 = ssub.s32 %s9, 1
    %s15 = ssub.s32 %s9, 2
    %s16 = sadd.s32 %s9, 1
    %s18 = sadd.s32 %s17, 1
    %p21 = scmp.eq.s32.totalorder %s9, 1
    %p22 = scmp.ne.s32.totalorder %s17, %s19
    %p23 = scmp.eq.s32.totalorder %s9, 0
    %p24 = por %p22, %p23
    %p25 = scmp.ne.s32.totalorder %s17, %s19
    %p26 = scmp.eq.s32.totalorder %s14, 1
    %p27 = por %p25, %p26
    %p28 = scmp.ne.s32.totalorder %s19, %s20
    %p29 = scmp.eq.s32.totalorder %s14, 0
    %p30 = por %p28, %p29
    %p31 = scmp.ne.s32.totalorder %s19, %s20
    %p32 = scmp.eq.s32.totalorder %s15, 1
    %p33 = por %p31, %p32
    %p35 = scmp.ne.s32.totalorder %s20, %s34
    %p36 = scmp.eq.s32.totalorder %s15, 0
    %p37 = por %p35, %p36
    %s38 = ssub.s32 %s9, %s16
    %p39 = scmp.eq.s32.totalorder %s38, 0
    %s41 = sadd.s32 %s40, 1
    %s42 = scalar_select %p39, %s40, %s41
    %p45 = pneg %p39
    %p46 = scmp.eq.s32.totalorder %s9, 1
    %p47 = por %p45, %p46
    %p48 = scmp.ne.s32.totalorder %s40, %s43
    %p49 = scmp.eq.s32.totalorder %s9, 0
    %p50 = por %p48, %p49
    %p51 = scmp.ne.s32.totalorder %s40, %s43
    %p52 = scmp.eq.s32.totalorder %s14, 1
    %p53 = por %p51, %p52
    %p54 = scmp.ne.s32.totalorder %s43, %s44
    %p55 = scmp.eq.s32.totalorder %s14, 0
    %p56 = por %p54, %p55
    %p57 = scmp.ne.s32.totalorder %s43, %s44
    %p58 = scmp.eq.s32.totalorder %s15, 1
    %p59 = por %p57, %p58
    %p61 = scmp.ne.s32.totalorder %s44, %s60
    %p62 = scmp.eq.s32.totalorder %s15, 0
    %p63 = por %p61, %p62
    %s65 = sadd.s32 %s64, 1
    %p68 = scmp.eq.s32.totalorder %s9, 1
    %p69 = scmp.ne.s32.totalorder %s64, %s66
    %p70 = scmp.eq.s32.totalorder %s9, 0
    %p71 = por %p69, %p70
    %p72 = scmp.ne.s32.totalorder %s64, %s66
    %p73 = scmp.eq.s32.totalorder %s14, 1
    %p74 = por %p72, %p73
    %p75 = scmp.ne.s32.totalorder %s66, %s67
    %p76 = scmp.eq.s32.totalorder %s14, 0
    %p77 = por %p75, %p76
    %p78 = scmp.ne.s32.totalorder %s66, %s67
    %p79 = scmp.eq.s32.totalorder %s15, 1
    %p80 = por %p78, %p79
    %p82 = scmp.ne.s32.totalorder %s67, %s81
    %p83 = scmp.eq.s32.totalorder %s15, 0
    %p84 = por %p82, %p83
    %s85 = ssub.s32 %s9, %s16
    %p86 = scmp.eq.s32.totalorder %s85, 0
    %s88 = sadd.s32 %s87, 1
    %s89 = scalar_select %p86, %s87, %s88
    %p92 = pneg %p86
    %p93 = scmp.eq.s32.totalorder %s9, 1
    %p94 = por %p92, %p93
    %p95 = scmp.ne.s32.totalorder %s87, %s90
    %p96 = scmp.eq.s32.totalorder %s9, 0
    %p97 = por %p95, %p96
    %p98 = scmp.ne.s32.totalorder %s87, %s90
    %p99 = scmp.eq.s32.totalorder %s14, 1
    %p100 = por %p98, %p99
    %p101 = scmp.ne.s32.totalorder %s90, %s91
    %p102 = scmp.eq.s32.totalorder %s14, 0
    %p103 = por %p101, %p102
    %p104 = scmp.ne.s32.totalorder %s90, %s91
    %p105 = scmp.eq.s32.totalorder %s15, 1
    %p106 = por %p104, %p105
    %p108 = scmp.ne.s32.totalorder %s91, %s107
    %p109 = scmp.eq.s32.totalorder %s15, 0
    %p110 = por %p108, %p109
    %p111 = scmp.le.s32.totalorder 1, %s9
    %p112 = scmp.lt.s32.totalorder %s9, 3
    %p113 = pnand %p111, %p112
    %p114 = pneg %p113
    // Predicated region
    $region9: #{cf_forward.4} parent=5 // pred_check
      _
    $region10: #{cf_forward.4} parent=5 // pred_check_branch
      %116 = sbr.rel (%p113) target = $region12
    $region11: #{cf_forward.4} parent=5 // pred_region
      %s117 = ssub.s32 %s9, 1
      // Predicated region
      $region13: #{cf_forward.4} parent=11 // pred_check
        %p118 = pneg %p30
      $region14: #{cf_forward.4} parent=11 // pred_check_branch
        %120 = sbr.rel (%p118) target = $region16
      $region15: #{cf_forward.4} parent=11 // pred_region
        _
      $region16: #{cf_forward.4} parent=11 // pred_fallthru
        _
      // Predicated region
      $region17: #{cf_forward.4} parent=11 // pred_check
        %p121 = pneg %p77
      $region18: #{cf_forward.4} parent=11 // pred_check_branch
        %123 = sbr.rel (%p121) target = $region20
      $region19: #{cf_forward.4} parent=11 // pred_region
        _
      $region20: #{cf_forward.4} parent=11 // pred_fallthru
        _
    $region12: #{cf_forward.4} parent=5 // pred_fallthru
      _
    %p124 = scmp.lt.s32.totalorder %s9, 2
    // Predicated region
    $region21: #{cf_forward.4} parent=5 // pred_check
      %p125 = pneg %p124
    $region22: #{cf_forward.4} parent=5 // pred_check_branch
      %127 = sbr.rel (%p125) target = $region24
    $region23: #{cf_forward.4} parent=5 // pred_region
      // Predicated region
      $region25: #{cf_forward.4} parent=23 // pred_check
        %p128 = pneg %p50
      $region26: #{cf_forward.4} parent=23 // pred_check_branch
        %130 = sbr.rel (%p128) target = $region28
      $region27: #{cf_forward.4} parent=23 // pred_region
        %p131 = scmp.lt.s32.totalorder %s9, 1
        %s132 = scalar_select %p131, %s9, 1
        %s133 = smul.addr %s132, 2
        %s134 = smul.addr %s133, 8
        %s135 = scalar_lea.vmem %s1, %s134
      $region28: #{cf_forward.4} parent=23 // pred_fallthru
        _
    $region24: #{cf_forward.4} parent=5 // pred_fallthru
      _
    %p136 = scmp.le.s32.totalorder 1, %s9
    %p137 = scmp.lt.s32.totalorder %s9, 3
    %p138 = pnand %p136, %p137
    %p139 = pneg %p138
    // Predicated region
    $region29: #{cf_forward.4} parent=5 // pred_check
      _
    $region30: #{cf_forward.4} parent=5 // pred_check_branch
      %141 = sbr.rel (%p138) target = $region32
    $region31: #{cf_forward.4} parent=5 // pred_region
      %s142 = ssub.s32 %s9, 1
      %p143 = pneg %p30
      %p144 = pneg %p27
      %p145 = scmp.lt.s32.totalorder %s14, 1
      %s146 = scalar_select %p145, %s14, 1
      %s147 = smul.addr %s146, 2
      %s148 = smul.addr %s147, 8
      %s149 = scalar_lea.vmem %s1, %s148
      %p150 = pneg %p56
      %p151 = pneg %p53
      %p152 = pneg %p77
      %p153 = pneg %p74
      %p154 = pneg %p103
      %p155 = pneg %p100
      %p156 = scmp.lt.s32.totalorder %s14, 1
      %s157 = scalar_select %p156, %s14, 1
      %s158 = smul.addr %s157, 6
      %s159 = smul.addr %s158, 8
      %s160 = scalar_lea.vmem %s3, %s159
      %p161 = scmp.lt.s32.totalorder %s14, 1
      %s162 = scalar_select %p161, %s14, 1
      %s163 = smul.addr %s162, 2
      %s164 = smul.addr %s163, 8
      %s165 = scalar_lea.vmem %s1, %s164
      %p166 = scmp.lt.s32.totalorder %s14, 1
      %s167 = scalar_select %p166, %s14, 1
      %s168 = smul.addr %s167, 6
      %s169 = smul.addr %s168, 8
      %s170 = scalar_lea.vmem %s3, %s169
      %v171 = vld [vmem:[%s165] sm:$0xff]
      %v172 = vld [vmem:[%s165 + $0x8] sm:$0xff]
      %173 = vrot.lane.b32.xlu0 %v171, 17
      %v174 = vpop.permute.xlu0 %173
      %175 = vrot.lane.b32.xlu0 %v172, 17
      %v176 = vpop.permute.xlu0 %175
      %v177 = vlaneseq
      %v178 = vand.u32 %v177, 127
      %vm179 = vcmp.lt.s32.totalorder %v178, 17
      %v180 = vsel %vm179, %v174, %v176
      %v181 = vsel %vm179, %v176, %v174
      %v182 = vld [vmem:[%s0] ss:$8 sm:$0x3]
      %v184 = vlaneseq
      %v185 = vshrl.u32 %v184, 7
      %v186 = vsub.s32 0, %v185
      %v187 = vrot.slane %v182, %v186
      %v188 = vlaneseq
      %v189 = vshrl.u32 %v188, 7
      %v190 = vsub.s32 1, %v189
      %v191 = vrot.slane %v182, %v190
      %v194 = vmul.f32 %v181, %v187
      %v195 = vmul.f32 %v180, %v191
      %v196 = vld [vmem:[%s2] sm:$0xff]
      %v197 = vld [vmem:[%s2 + $0x8] sm:$0xff]
      %v198 = vld [vmem:[%s2 + $0x10] sm:$0x3]
      %199 = vrot.lane.b32.xlu0 %v171, 16
      %v200 = vpop.permute.xlu0 %199
      %201 = vrot.lane.b32.xlu0 %v172, 16
      %v202 = vpop.permute.xlu0 %201
      %vm203 = vcmp.lt.s32.totalorder %v178, 16
      %v204 = vsel %vm203, %v200, %v202
      %v205 = vsel %vm203, %v202, %v200
      %s206 = scalar_lea.vmem %s0, 1
      %v207 = vld [vmem:[%s206] ss:$8 sm:$0x3]
      %v209 = vlaneseq
      %v210 = vshrl.u32 %v209, 7
      %v211 = vsub.s32 0, %v210
      %v212 = vrot.slane %v207, %v211
      %v213 = vlaneseq
      %v214 = vshrl.u32 %v213, 7
      %v215 = vsub.s32 1, %v214
      %v216 = vrot.slane %v207, %v215
      %v219 = vmul.f32 %v205, %v212
      %v220 = vmul.f32 %v204, %v216
      %s221 = scalar_lea.vmem %s2, 24
      %v222 = vld [vmem:[%s221] sm:$0xff]
      %v223 = vld [vmem:[%s221 + $0x8] sm:$0xff]
      %v224 = vld [vmem:[%s221 + $0x10] sm:$0x3]
      %vm225 = vcmask 64512
      %v227 = vsel %vm225, %v222, 0
      %v230 = vsel %vm225, %v223, 0
      %v233 = vsel %vm225, %v224, 0
      %235 = vmatprep.subr.mxu0 %v220
      %236 = vmatpush1.msra.mxu0 %v219
      %237 = vmatprep.subr.mxu0 0.0
      %238 = vmatpush1.msra.mxu0 0.0
      %239 = vmatprep.subr.mxu0 0.0
      %240 = vmatpush1.msra.mxu0 0.0
      %241 = vmatprep.subr.mxu0 0.0
      %242 = vmatpush1.msra.mxu0 0.0
      %243 = vmatprep.subr.mxu0 0.0
      %244 = vmatpush1.msra.mxu0 0.0
      %245 = vmatprep.subr.mxu0 0.0
      %246 = vmatpush1.msra.mxu0 0.0
      %247 = vmatprep.subr.mxu0 0.0
      %248 = vmatpush1.msra.mxu0 0.0
      %249 = vmatprep.subr.mxu0 0.0
      %250 = vmatpush1.msra.mxu0 0.0
      %251 = vmatprep.subr.mxu0 0.0
      %252 = vmatpush1.msra.mxu0 0.0
      %253 = vmatprep.subr.mxu0 0.0
      %254 = vmatpush1.msra.mxu0 0.0
      %255 = vmatprep.subr.mxu0 0.0
      %256 = vmatpush1.msra.mxu0 0.0
      %257 = vmatprep.subr.mxu0 0.0
      %258 = vmatpush1.msra.mxu0 0.0
      %259 = vmatprep.subr.mxu0 0.0
      %260 = vmatpush1.msra.mxu0 0.0
      %261 = vmatprep.subr.mxu0 0.0
      %262 = vmatpush1.msra.mxu0 0.0
      %263 = vmatprep.subr.mxu0 0.0
      %264 = vmatpush1.msra.mxu0 0.0
      %265 = vmatprep.subr.mxu0 0.0
      %266 = vmatpush1.msra.mxu0 0.0
      %267 = vmatprep.subr.mxu0 0.0
      %268 = vmatpush1.msra.mxu0 0.0
      %269 = vmatprep.subr.mxu0 0.0
      %270 = vmatpush1.msra.mxu0 0.0
      %271 = vmatprep.subr.mxu0 0.0
      %272 = vmatpush1.msra.mxu0 0.0
      %273 = vmatprep.subr.mxu0 0.0
      %274 = vmatpush1.msra.mxu0 0.0
      %275 = vmatprep.subr.mxu0 0.0
      %276 = vmatpush1.msra.mxu0 0.0
      %277 = vmatprep.subr.mxu0 0.0
      %278 = vmatpush1.msra.mxu0 0.0
      %279 = vmatprep.subr.mxu0 0.0
      %280 = vmatpush1.msra.mxu0 0.0
      %281 = vmatprep.subr.mxu0 0.0
      %282 = vmatpush1.msra.mxu0 0.0
      %283 = vmatprep.subr.mxu0 0.0
      %284 = vmatpush1.msra.mxu0 0.0
      %285 = vmatprep.subr.mxu0 0.0
      %286 = vmatpush1.msra.mxu0 0.0
      %287 = vmatprep.subr.mxu0 0.0
      %288 = vmatpush1.msra.mxu0 0.0
      %289 = vmatprep.subr.mxu0 0.0
      %290 = vmatpush1.msra.mxu0 0.0
      %291 = vmatprep.subr.mxu0 0.0
      %292 = vmatpush1.msra.mxu0 0.0
      %293 = vmatprep.subr.mxu0 0.0
      %294 = vmatpush1.msra.mxu0 0.0
      %295 = vmatprep.subr.mxu0 0.0
      %296 = vmatpush1.msra.mxu0 0.0
      %297 = vmatprep.subr.mxu0 0.0
      %298 = vmatpush1.msra.mxu0 0.0
      %299 = vmatprep.mubr.f32.mxu0 0.0
      %300 = vmatmul.mubr.f32.gmra.mrb[0].mxu0 %v227
      %v301 = vpop.f32.mrb[0].mxu0
      %v302 = vadd.f32 0.0, %v301
      %v303 = vpop.f32.mrb[0].mxu0
      %v304 = vadd.f32 0.0, %v303
      %305 = vmatprep.mubr.f32.mxu0 0.0
      %306 = vmatmul.mubr.f32.gmra.mrb[0].mxu0 %v230
      %v307 = vpop.f32.mrb[0].mxu0
      %v308 = vadd.f32 0.0, %v307
      %v309 = vpop.f32.mrb[0].mxu0
      %v310 = vadd.f32 0.0, %v309
      %311 = vmatprep.mubr.f32.mxu0 0.0
      %312 = vmatmul.mubr.f32.gmra.mrb[0].mxu0 %v233
      %v313 = vpop.f32.mrb[0].mxu0
      %v314 = vadd.f32 0.0, %v313
      %v315 = vpop.f32.mrb[0].mxu0
      %v316 = vadd.f32 0.0, %v315
      %317 = vdwg.mxu0
      %v319 = vsel %vm225, %v196, 0
      %v322 = vsel %vm225, %v197, 0
      %v325 = vsel %vm225, %v198, 0
      %327 = vmatprep.subr.mxu0 %v195
      %328 = vmatpush1.msra.mxu0 %v194
      %329 = vmatprep.subr.mxu0 0.0
      %330 = vmatpush1.msra.mxu0 0.0
      %331 = vmatprep.subr.mxu0 0.0
      %332 = vmatpush1.msra.mxu0 0.0
      %333 = vmatprep.subr.mxu0 0.0
      %334 = vmatpush1.msra.mxu0 0.0
      %335 = vmatprep.subr.mxu0 0.0
      %336 = vmatpush1.msra.mxu0 0.0
      %337 = vmatprep.subr.mxu0 0.0
      %338 = vmatpush1.msra.mxu0 0.0
      %339 = vmatprep.subr.mxu0 0.0
      %340 = vmatpush1.msra.mxu0 0.0
      %341 = vmatprep.subr.mxu0 0.0
      %342 = vmatpush1.msra.mxu0 0.0
      %343 = vmatprep.subr.mxu0 0.0
      %344 = vmatpush1.msra.mxu0 0.0
      %345 = vmatprep.subr.mxu0 0.0
      %346 = vmatpush1.msra.mxu0 0.0
      %347 = vmatprep.subr.mxu0 0.0
      %348 = vmatpush1.msra.mxu0 0.0
      %349 = vmatprep.subr.mxu0 0.0
      %350 = vmatpush1.msra.mxu0 0.0
      %351 = vmatprep.subr.mxu0 0.0
      %352 = vmatpush1.msra.mxu0 0.0
      %353 = vmatprep.subr.mxu0 0.0
      %354 = vmatpush1.msra.mxu0 0.0
      %355 = vmatprep.subr.mxu0 0.0
      %356 = vmatpush1.msra.mxu0 0.0
      %357 = vmatprep.subr.mxu0 0.0
      %358 = vmatpush1.msra.mxu0 0.0
      %359 = vmatprep.subr.mxu0 0.0
      %360 = vmatpush1.msra.mxu0 0.0
      %361 = vmatprep.subr.mxu0 0.0
      %362 = vmatpush1.msra.mxu0 0.0
      %363 = vmatprep.subr.mxu0 0.0
      %364 = vmatpush1.msra.mxu0 0.0
      %365 = vmatprep.subr.mxu0 0.0
      %366 = vmatpush1.msra.mxu0 0.0
      %367 = vmatprep.subr.mxu0 0.0
      %368 = vmatpush1.msra.mxu0 0.0
      %369 = vmatprep.subr.mxu0 0.0
      %370 = vmatpush1.msra.mxu0 0.0
      %371 = vmatprep.subr.mxu0 0.0
      %372 = vmatpush1.msra.mxu0 0.0
      %373 = vmatprep.subr.mxu0 0.0
      %374 = vmatpush1.msra.mxu0 0.0
      %375 = vmatprep.subr.mxu0 0.0
      %376 = vmatpush1.msra.mxu0 0.0
      %377 = vmatprep.subr.mxu0 0.0
      %378 = vmatpush1.msra.mxu0 0.0
      %379 = vmatprep.subr.mxu0 0.0
      %380 = vmatpush1.msra.mxu0 0.0
      %381 = vmatprep.subr.mxu0 0.0
      %382 = vmatpush1.msra.mxu0 0.0
      %383 = vmatprep.subr.mxu0 0.0
      %384 = vmatpush1.msra.mxu0 0.0
      %385 = vmatprep.subr.mxu0 0.0
      %386 = vmatpush1.msra.mxu0 0.0
      %387 = vmatprep.subr.mxu0 0.0
      %388 = vmatpush1.msra.mxu0 0.0
      %389 = vmatprep.subr.mxu0 0.0
      %390 = vmatpush1.msra.mxu0 0.0
      %391 = vmatprep.mubr.f32.mxu0 0.0
      %392 = vmatmul.mubr.f32.gmra.mrb[0].mxu0 %v319
      %v393 = vpop.f32.mrb[0].mxu0
      %v394 = vadd.f32 %v302, %v393
      %v395 = vpop.f32.mrb[0].mxu0
      %v396 = vadd.f32 %v304, %v395
      %397 = vmatprep.mubr.f32.mxu0 0.0
      %398 = vmatmul.mubr.f32.gmra.mrb[0].mxu0 %v322
      %v399 = vpop.f32.mrb[0].mxu0
      %v400 = vadd.f32 %v308, %v399
      %v401 = vpop.f32.mrb[0].mxu0
      %v402 = vadd.f32 %v310, %v401
      %403 = vmatprep.mubr.f32.mxu0 0.0
      %404 = vmatmul.mubr.f32.gmra.mrb[0].mxu0 %v325
      %v405 = vpop.f32.mrb[0].mxu0
      %v406 = vadd.f32 %v314, %v405
      %v407 = vpop.f32.mrb[0].mxu0
      %v408 = vadd.f32 %v316, %v407
      %409 = vdwg.mxu0
      %410 = vrot.lane.b32.xlu0 %v171, 15
      %v411 = vpop.permute.xlu0 %410
      %412 = vrot.lane.b32.xlu0 %v172, 15
      %v413 = vpop.permute.xlu0 %412
      %vm414 = vcmp.lt.s32.totalorder %v178, 15
      %v415 = vsel %vm414, %v411, %v413
      %v416 = vsel %vm414, %v413, %v411
      %s417 = scalar_lea.vmem %s0, 2
      %v418 = vld [vmem:[%s417] ss:$8 sm:$0x3]
      %v420 = vlaneseq
      %v421 = vshrl.u32 %v420, 7
      %v422 = vsub.s32 0, %v421
      %v423 = vrot.slane %v418, %v422
      %v424 = vlaneseq
      %v425 = vshrl.u32 %v424, 7
      %v426 = vsub.s32 1, %v425
      %v427 = vrot.slane %v418, %v426
      %v430 = vmul.f32 %v416, %v423
      %v431 = vmul.f32 %v415, %v427
      %s432 = scalar_lea.vmem %s2, 48
      %v433 = vld [vmem:[%s432] sm:$0xff]
      %v434 = vld [vmem:[%s432 + $0x8] sm:$0xff]
      %v435 = vld [vmem:[%s432 + $0x10] sm:$0x3]
      %v437 = vsel %vm225, %v433, 0
      %v440 = vsel %vm225, %v434, 0
      %v443 = vsel %vm225, %v435, 0
      %445 = vmatprep.subr.mxu0 %v431
      %446 = vmatpush1.msra.mxu0 %v430
      %447 = vmatprep.subr.mxu0 0.0
      %448 = vmatpush1.msra.mxu0 0.0
      %449 = vmatprep.subr.mxu0 0.0
      %450 = vmatpush1.msra.mxu0 0.0
      %451 = vmatprep.subr.mxu0 0.0
      %452 = vmatpush1.msra.mxu0 0.0
      %453 = vmatprep.subr.mxu0 0.0
      %454 = vmatpush1.msra.mxu0 0.0
      %455 = vmatprep.subr.mxu0 0.0
      %456 = vmatpush1.msra.mxu0 0.0
      %457 = vmatprep.subr.mxu0 0.0
      %458 = vmatpush1.msra.mxu0 0.0
      %459 = vmatprep.subr.mxu0 0.0
      %460 = vmatpush1.msra.mxu0 0.0
      %461 = vmatprep.subr.mxu0 0.0
      %462 = vmatpush1.msra.mxu0 0.0
      %463 = vmatprep.subr.mxu0 0.0
      %464 = vmatpush1.msra.mxu0 0.0
      %465 = vmatprep.subr.mxu0 0.0
      %466 = vmatpush1.msra.mxu0 0.0
      %467 = vmatprep.subr.mxu0 0.0
      %468 = vmatpush1.msra.mxu0 0.0
      %469 = vmatprep.subr.mxu0 0.0
      %470 = vmatpush1.msra.mxu0 0.0
      %471 = vmatprep.subr.mxu0 0.0
      %472 = vmatpush1.msra.mxu0 0.0
      %473 = vmatprep.subr.mxu0 0.0
      %474 = vmatpush1.msra.mxu0 0.0
      %475 = vmatprep.subr.mxu0 0.0
      %476 = vmatpush1.msra.mxu0 0.0
      %477 = vmatprep.subr.mxu0 0.0
      %478 = vmatpush1.msra.mxu0 0.0
      %479 = vmatprep.subr.mxu0 0.0
      %480 = vmatpush1.msra.mxu0 0.0
      %481 = vmatprep.subr.mxu0 0.0
      %482 = vmatpush1.msra.mxu0 0.0
      %483 = vmatprep.subr.mxu0 0.0
      %484 = vmatpush1.msra.mxu0 0.0
      %485 = vmatprep.subr.mxu0 0.0
      %486 = vmatpush1.msra.mxu0 0.0
      %487 = vmatprep.subr.mxu0 0.0
      %488 = vmatpush1.msra.mxu0 0.0
      %489 = vmatprep.subr.mxu0 0.0
      %490 = vmatpush1.msra.mxu0 0.0
      %491 = vmatprep.subr.mxu0 0.0
      %492 = vmatpush1.msra.mxu0 0.0
      %493 = vmatprep.subr.mxu0 0.0
      %494 = vmatpush1.msra.mxu0 0.0
      %495 = vmatprep.subr.mxu0 0.0
      %496 = vmatpush1.msra.mxu0 0.0
      %497 = vmatprep.subr.mxu0 0.0
      %498 = vmatpush1.msra.mxu0 0.0
      %499 = vmatprep.subr.mxu0 0.0
      %500 = vmatpush1.msra.mxu0 0.0
      %501 = vmatprep.subr.mxu0 0.0
      %502 = vmatpush1.msra.mxu0 0.0
      %503 = vmatprep.subr.mxu0 0.0
      %504 = vmatpush1.msra.mxu0 0.0
      %505 = vmatprep.subr.mxu0 0.0
      %506 = vmatpush1.msra.mxu0 0.0
      %507 = vmatprep.subr.mxu0 0.0
      %508 = vmatpush1.msra.mxu0 0.0
      %509 = vmatprep.mubr.f32.mxu0 0.0
      %510 = vmatmul.mubr.f32.gmra.mrb[0].mxu0 %v437
      %v511 = vpop.f32.mrb[0].mxu0
      %v512 = vadd.f32 0.0, %v511
      %v513 = vpop.f32.mrb[0].mxu0
      %v514 = vadd.f32 0.0, %v513
      %515 = vmatprep.mubr.f32.mxu0 0.0
      %516 = vmatmul.mubr.f32.gmra.mrb[0].mxu0 %v440
      %v517 = vpop.f32.mrb[0].mxu0
      %v518 = vadd.f32 0.0, %v517
      %v519 = vpop.f32.mrb[0].mxu0
      %v520 = vadd.f32 0.0, %v519
      %521 = vmatprep.mubr.f32.mxu0 0.0
      %522 = vmatmul.mubr.f32.gmra.mrb[0].mxu0 %v443
      %v523 = vpop.f32.mrb[0].mxu0
      %v524 = vadd.f32 0.0, %v523
      %v525 = vpop.f32.mrb[0].mxu0
      %v526 = vadd.f32 0.0, %v525
      %527 = vdwg.mxu0
      %v528 = vadd.f32 %v394, %v512
      %v529 = vadd.f32 %v396, %v514
      %v530 = vadd.f32 %v400, %v518
      %v531 = vadd.f32 %v402, %v520
      %v532 = vadd.f32 %v406, %v524
      %v533 = vadd.f32 %v408, %v526
      %534 = vrot.lane.b32.xlu0 %v171, 1
      %v535 = vpop.permute.xlu0 %534
      %536 = vrot.lane.b32.xlu0 %v172, 1
      %v537 = vpop.permute.xlu0 %536
      %vm538 = vcmp.lt.s32.totalorder %v178, 1
      %v539 = vsel %vm538, %v535, %v537
      %v540 = vsel %vm538, %v537, %v535
      %s541 = scalar_lea.vmem %s0, 3
      %v542 = vld [vmem:[%s541] ss:$8 sm:$0x3]
      %v544 = vlaneseq
      %v545 = vshrl.u32 %v544, 7
      %v546 = vsub.s32 0, %v545
      %v547 = vrot.slane %v542, %v546
      %v548 = vlaneseq
      %v549 = vshrl.u32 %v548, 7
      %v550 = vsub.s32 1, %v549
      %v551 = vrot.slane %v542, %v550
      %v554 = vmul.f32 %v540, %v547
      %v555 = vmul.f32 %v539, %v551
      %s556 = scalar_lea.vmem %s2, 72
      %v557 = vld [vmem:[%s556] sm:$0xff]
      %v558 = vld [vmem:[%s556 + $0x8] sm:$0xff]
      %v559 = vld [vmem:[%s556 + $0x10] sm:$0x3]
      %v561 = vsel %vm225, %v557, 0
      %v564 = vsel %vm225, %v558, 0
      %v567 = vsel %vm225, %v559, 0
      %569 = vmatprep.subr.mxu0 %v555
      %570 = vmatpush1.msra.mxu0 %v554
      %571 = vmatprep.subr.mxu0 0.0
      %572 = vmatpush1.msra.mxu0 0.0
      %573 = vmatprep.subr.mxu0 0.0
      %574 = vmatpush1.msra.mxu0 0.0
      %575 = vmatprep.subr.mxu0 0.0
      %576 = vmatpush1.msra.mxu0 0.0
      %577 = vmatprep.subr.mxu0 0.0
      %578 = vmatpush1.msra.mxu0 0.0
      %579 = vmatprep.subr.mxu0 0.0
      %580 = vmatpush1.msra.mxu0 0.0
      %581 = vmatprep.subr.mxu0 0.0
      %582 = vmatpush1.msra.mxu0 0.0
      %583 = vmatprep.subr.mxu0 0.0
      %584 = vmatpush1.msra.mxu0 0.0
      %585 = vmatprep.subr.mxu0 0.0
      %586 = vmatpush1.msra.mxu0 0.0
      %587 = vmatprep.subr.mxu0 0.0
      %588 = vmatpush1.msra.mxu0 0.0
      %589 = vmatprep.subr.mxu0 0.0
      %590 = vmatpush1.msra.mxu0 0.0
      %591 = vmatprep.subr.mxu0 0.0
      %592 = vmatpush1.msra.mxu0 0.0
      %593 = vmatprep.subr.mxu0 0.0
      %594 = vmatpush1.msra.mxu0 0.0
      %595 = vmatprep.subr.mxu0 0.0
      %596 = vmatpush1.msra.mxu0 0.0
      %597 = vmatprep.subr.mxu0 0.0
      %598 = vmatpush1.msra.mxu0 0.0
      %599 = vmatprep.subr.mxu0 0.0
      %600 = vmatpush1.msra.mxu0 0.0
      %601 = vmatprep.subr.mxu0 0.0
      %602 = vmatpush1.msra.mxu0 0.0
      %603 = vmatprep.subr.mxu0 0.0
      %604 = vmatpush1.msra.mxu0 0.0
      %605 = vmatprep.subr.mxu0 0.0
      %606 = vmatpush1.msra.mxu0 0.0
      %607 = vmatprep.subr.mxu0 0.0
      %608 = vmatpush1.msra.mxu0 0.0
      %609 = vmatprep.subr.mxu0 0.0
      %610 = vmatpush1.msra.mxu0 0.0
      %611 = vmatprep.subr.mxu0 0.0
      %612 = vmatpush1.msra.mxu0 0.0
      %613 = vmatprep.subr.mxu0 0.0
      %614 = vmatpush1.msra.mxu0 0.0
      %615 = vmatprep.subr.mxu0 0.0
      %616 = vmatpush1.msra.mxu0 0.0
      %617 = vmatprep.subr.mxu0 0.0
      %618 = vmatpush1.msra.mxu0 0.0
      %619 = vmatprep.subr.mxu0 0.0
      %620 = vmatpush1.msra.mxu0 0.0
      %621 = vmatprep.subr.mxu0 0.0
      %622 = vmatpush1.msra.mxu0 0.0
      %623 = vmatprep.subr.mxu0 0.0
      %624 = vmatpush1.msra.mxu0 0.0
      %625 = vmatprep.subr.mxu0 0.0
      %626 = vmatpush1.msra.mxu0 0.0
      %627 = vmatprep.subr.mxu0 0.0
      %628 = vmatpush1.msra.mxu0 0.0
      %629 = vmatprep.subr.mxu0 0.0
      %630 = vmatpush1.msra.mxu0 0.0
      %631 = vmatprep.subr.mxu0 0.0
      %632 = vmatpush1.msra.mxu0 0.0
      %633 = vmatprep.mubr.f32.mxu0 0.0
      %634 = vmatmul.mubr.f32.gmra.mrb[0].mxu0 %v561
      %v635 = vpop.f32.mrb[0].mxu0
      %v636 = vadd.f32 0.0, %v635
      %v637 = vpop.f32.mrb[0].mxu0
      %v638 = vadd.f32 0.0, %v637
      %639 = vmatprep.mubr.f32.mxu0 0.0
      %640 = vmatmul.mubr.f32.gmra.mrb[0].mxu0 %v564
      %v641 = vpop.f32.mrb[0].mxu0
      %v642 = vadd.f32 0.0, %v641
      %v643 = vpop.f32.mrb[0].mxu0
      %v644 = vadd.f32 0.0, %v643
      %645 = vmatprep.mubr.f32.mxu0 0.0
      %646 = vmatmul.mubr.f32.gmra.mrb[0].mxu0 %v567
      %v647 = vpop.f32.mrb[0].mxu0
      %v648 = vadd.f32 0.0, %v647
      %v649 = vpop.f32.mrb[0].mxu0
      %v650 = vadd.f32 0.0, %v649
      %651 = vdwg.mxu0
      %v652 = vadd.f32 %v528, %v636
      %v653 = vadd.f32 %v529, %v638
      %v654 = vadd.f32 %v530, %v642
      %v655 = vadd.f32 %v531, %v644
      %v656 = vadd.f32 %v532, %v648
      %v657 = vadd.f32 %v533, %v650
      %s658 = scalar_lea.vmem %s2, 96
      %v659 = vld [vmem:[%s658] sm:$0xff]
      %v660 = vld [vmem:[%s658 + $0x8] sm:$0xff]
      %v661 = vld [vmem:[%s658 + $0x10] sm:$0x3]
      %v663 = vsel %vm225, %v659, 0
      %v666 = vsel %vm225, %v660, 0
      %v669 = vsel %vm225, %v661, 0
      %671 = vmatprep.subr.mxu0 %v172
      %672 = vmatpush1.msra.mxu0 %v171
      %673 = vmatprep.subr.mxu0 0.0
      %674 = vmatpush1.msra.mxu0 0.0
      %675 = vmatprep.subr.mxu0 0.0
      %676 = vmatpush1.msra.mxu0 0.0
      %677 = vmatprep.subr.mxu0 0.0
      %678 = vmatpush1.msra.mxu0 0.0
      %679 = vmatprep.subr.mxu0 0.0
      %680 = vmatpush1.msra.mxu0 0.0
      %681 = vmatprep.subr.mxu0 0.0
      %682 = vmatpush1.msra.mxu0 0.0
      %683 = vmatprep.subr.mxu0 0.0
      %684 = vmatpush1.msra.mxu0 0.0
      %685 = vmatprep.subr.mxu0 0.0
      %686 = vmatpush1.msra.mxu0 0.0
      %687 = vmatprep.subr.mxu0 0.0
      %688 = vmatpush1.msra.mxu0 0.0
      %689 = vmatprep.subr.mxu0 0.0
      %690 = vmatpush1.msra.mxu0 0.0
      %691 = vmatprep.subr.mxu0 0.0
      %692 = vmatpush1.msra.mxu0 0.0
      %693 = vmatprep.subr.mxu0 0.0
      %694 = vmatpush1.msra.mxu0 0.0
      %695 = vmatprep.subr.mxu0 0.0
      %696 = vmatpush1.msra.mxu0 0.0
      %697 = vmatprep.subr.mxu0 0.0
      %698 = vmatpush1.msra.mxu0 0.0
      %699 = vmatprep.subr.mxu0 0.0
      %700 = vmatpush1.msra.mxu0 0.0
      %701 = vmatprep.subr.mxu0 0.0
      %702 = vmatpush1.msra.mxu0 0.0
      %703 = vmatprep.subr.mxu0 0.0
      %704 = vmatpush1.msra.mxu0 0.0
      %705 = vmatprep.subr.mxu0 0.0
      %706 = vmatpush1.msra.mxu0 0.0
      %707 = vmatprep.subr.mxu0 0.0
      %708 = vmatpush1.msra.mxu0 0.0
      %709 = vmatprep.subr.mxu0 0.0
      %710 = vmatpush1.msra.mxu0 0.0
      %711 = vmatprep.subr.mxu0 0.0
      %712 = vmatpush1.msra.mxu0 0.0
      %713 = vmatprep.subr.mxu0 0.0
      %714 = vmatpush1.msra.mxu0 0.0
      %715 = vmatprep.subr.mxu0 0.0
      %716 = vmatpush1.msra.mxu0 0.0
      %717 = vmatprep.subr.mxu0 0.0
      %718 = vmatpush1.msra.mxu0 0.0
      %719 = vmatprep.subr.mxu0 0.0
      %720 = vmatpush1.msra.mxu0 0.0
      %721 = vmatprep.subr.mxu0 0.0
      %722 = vmatpush1.msra.mxu0 0.0
      %723 = vmatprep.subr.mxu0 0.0
      %724 = vmatpush1.msra.mxu0 0.0
      %725 = vmatprep.subr.mxu0 0.0
      %726 = vmatpush1.msra.mxu0 0.0
      %727 = vmatprep.subr.mxu0 0.0
      %728 = vmatpush1.msra.mxu0 0.0
      %729 = vmatprep.subr.mxu0 0.0
      %730 = vmatpush1.msra.mxu0 0.0
      %731 = vmatprep.subr.mxu0 0.0
      %732 = vmatpush1.msra.mxu0 0.0
      %733 = vmatprep.subr.mxu0 0.0
      %734 = vmatpush1.msra.mxu0 0.0
      %735 = vmatprep.mubr.f32.mxu0 0.0
      %736 = vmatmul.mubr.f32.gmra.mrb[0].mxu0 %v663
      %v737 = vpop.f32.mrb[0].mxu0
      %v738 = vadd.f32 0.0, %v737
      %v739 = vpop.f32.mrb[0].mxu0
      %v740 = vadd.f32 0.0, %v739
      %741 = vmatprep.mubr.f32.mxu0 0.0
      %742 = vmatmul.mubr.f32.gmra.mrb[0].mxu0 %v666
      %v743 = vpop.f32.mrb[0].mxu0
      %v744 = vadd.f32 0.0, %v743
      %v745 = vpop.f32.mrb[0].mxu0
      %v746 = vadd.f32 0.0, %v745
      %747 = vmatprep.mubr.f32.mxu0 0.0
      %748 = vmatmul.mubr.f32.gmra.mrb[0].mxu0 %v669
      %v749 = vpop.f32.mrb[0].mxu0
      %v750 = vadd.f32 0.0, %v749
      %v751 = vpop.f32.mrb[0].mxu0
      %v752 = vadd.f32 0.0, %v751
      %753 = vdwg.mxu0
      %v754 = vadd.f32 %v652, %v738
      %v755 = vadd.f32 %v653, %v740
      %v756 = vadd.f32 %v654, %v744
      %v757 = vadd.f32 %v655, %v746
      %v758 = vadd.f32 %v656, %v750
      %v759 = vadd.f32 %v657, %v752
      %760 = vrot.lane.b32.xlu0 %v171, 127
      %v761 = vpop.permute.xlu0 %760
      %762 = vrot.lane.b32.xlu0 %v172, 127
      %v763 = vpop.permute.xlu0 %762
      %vm764 = vcmp.lt.s32.totalorder %v178, 127
      %v765 = vsel %vm764, %v761, %v763
      %v766 = vsel %vm764, %v763, %v761
      %s767 = scalar_lea.vmem %s0, 5
      %v768 = vld [vmem:[%s767] ss:$8 sm:$0x3]
      %v770 = vlaneseq
      %v771 = vshrl.u32 %v770, 7
      %v772 = vsub.s32 0, %v771
      %v773 = vrot.slane %v768, %v772
      %v774 = vlaneseq
      %v775 = vshrl.u32 %v774, 7
      %v776 = vsub.s32 1, %v775
      %v777 = vrot.slane %v768, %v776
      %v780 = vmul.f32 %v765, %v773
      %v781 = vmul.f32 %v766, %v777
      %s782 = scalar_lea.vmem %s2, 120
      %v783 = vld [vmem:[%s782] sm:$0xff]
      %v784 = vld [vmem:[%s782 + $0x8] sm:$0xff]
      %v785 = vld [vmem:[%s782 + $0x10] sm:$0x3]
      %v787 = vsel %vm225, %v783, 0
      %v790 = vsel %vm225, %v784, 0
      %v793 = vsel %vm225, %v785, 0
      %795 = vmatprep.subr.mxu0 %v781
      %796 = vmatpush1.msra.mxu0 %v780
      %797 = vmatprep.subr.mxu0 0.0
      %798 = vmatpush1.msra.mxu0 0.0
      %799 = vmatprep.subr.mxu0 0.0
      %800 = vmatpush1.msra.mxu0 0.0
      %801 = vmatprep.subr.mxu0 0.0
      %802 = vmatpush1.msra.mxu0 0.0
      %803 = vmatprep.subr.mxu0 0.0
      %804 = vmatpush1.msra.mxu0 0.0
      %805 = vmatprep.subr.mxu0 0.0
      %806 = vmatpush1.msra.mxu0 0.0
      %807 = vmatprep.subr.mxu0 0.0
      %808 = vmatpush1.msra.mxu0 0.0
      %809 = vmatprep.subr.mxu0 0.0
      %810 = vmatpush1.msra.mxu0 0.0
      %811 = vmatprep.subr.mxu0 0.0
      %812 = vmatpush1.msra.mxu0 0.0
      %813 = vmatprep.subr.mxu0 0.0
      %814 = vmatpush1.msra.mxu0 0.0
      %815 = vmatprep.subr.mxu0 0.0
      %816 = vmatpush1.msra.mxu0 0.0
      %817 = vmatprep.subr.mxu0 0.0
      %818 = vmatpush1.msra.mxu0 0.0
      %819 = vmatprep.subr.mxu0 0.0
      %820 = vmatpush1.msra.mxu0 0.0
      %821 = vmatprep.subr.mxu0 0.0
      %822 = vmatpush1.msra.mxu0 0.0
      %823 = vmatprep.subr.mxu0 0.0
      %824 = vmatpush1.msra.mxu0 0.0
      %825 = vmatprep.subr.mxu0 0.0
      %826 = vmatpush1.msra.mxu0 0.0
      %827 = vmatprep.subr.mxu0 0.0
      %828 = vmatpush1.msra.mxu0 0.0
      %829 = vmatprep.subr.mxu0 0.0
      %830 = vmatpush1.msra.mxu0 0.0
      %831 = vmatprep.subr.mxu0 0.0
      %832 = vmatpush1.msra.mxu0 0.0
      %833 = vmatprep.subr.mxu0 0.0
      %834 = vmatpush1.msra.mxu0 0.0
      %835 = vmatprep.subr.mxu0 0.0
      %836 = vmatpush1.msra.mxu0 0.0
      %837 = vmatprep.subr.mxu0 0.0
      %838 = vmatpush1.msra.mxu0 0.0
      %839 = vmatprep.subr.mxu0 0.0
      %840 = vmatpush1.msra.mxu0 0.0
      %841 = vmatprep.subr.mxu0 0.0
      %842 = vmatpush1.msra.mxu0 0.0
      %843 = vmatprep.subr.mxu0 0.0
      %844 = vmatpush1.msra.mxu0 0.0
      %845 = vmatprep.subr.mxu0 0.0
      %846 = vmatpush1.msra.mxu0 0.0
      %847 = vmatprep.subr.mxu0 0.0
      %848 = vmatpush1.msra.mxu0 0.0
      %849 = vmatprep.subr.mxu0 0.0
      %850 = vmatpush1.msra.mxu0 0.0
      %851 = vmatprep.subr.mxu0 0.0
      %852 = vmatpush1.msra.mxu0 0.0
      %853 = vmatprep.subr.mxu0 0.0
      %854 = vmatpush1.msra.mxu0 0.0
      %855 = vmatprep.subr.mxu0 0.0
      %856 = vmatpush1.msra.mxu0 0.0
      %857 = vmatprep.subr.mxu0 0.0
      %858 = vmatpush1.msra.mxu0 0.0
      %859 = vmatprep.mubr.f32.mxu0 0.0
      %860 = vmatmul.mubr.f32.gmra.mrb[0].mxu0 %v787
      %v861 = vpop.f32.mrb[0].mxu0
      %v862 = vadd.f32 0.0, %v861
      %v863 = vpop.f32.mrb[0].mxu0
      %v864 = vadd.f32 0.0, %v863
      %865 = vmatprep.mubr.f32.mxu0 0.0
      %866 = vmatmul.mubr.f32.gmra.mrb[0].mxu0 %v790
      %v867 = vpop.f32.mrb[0].mxu0
      %v868 = vadd.f32 0.0, %v867
      %v869 = vpop.f32.mrb[0].mxu0
      %v870 = vadd.f32 0.0, %v869
      %871 = vmatprep.mubr.f32.mxu0 0.0
      %872 = vmatmul.mubr.f32.gmra.mrb[0].mxu0 %v793
      %v873 = vpop.f32.mrb[0].mxu0
      %v874 = vadd.f32 0.0, %v873
      %v875 = vpop.f32.mrb[0].mxu0
      %v876 = vadd.f32 0.0, %v875
      %877 = vdwg.mxu0
      %v878 = vadd.f32 %v754, %v862
      %v879 = vadd.f32 %v755, %v864
      %v880 = vadd.f32 %v756, %v868
      %v881 = vadd.f32 %v757, %v870
      %v882 = vadd.f32 %v758, %v874
      %v883 = vadd.f32 %v759, %v876
      %884 = vrot.lane.b32.xlu0 %v171, 113
      %v885 = vpop.permute.xlu0 %884
      %886 = vrot.lane.b32.xlu0 %v172, 113
      %v887 = vpop.permute.xlu0 %886
      %vm888 = vcmp.lt.s32.totalorder %v178, 113
      %v889 = vsel %vm888, %v885, %v887
      %v890 = vsel %vm888, %v887, %v885
      %s891 = scalar_lea.vmem %s0, 6
      %v892 = vld [vmem:[%s891] ss:$8 sm:$0x3]
      %v894 = vlaneseq
      %v895 = vshrl.u32 %v894, 7
      %v896 = vsub.s32 0, %v895
      %v897 = vrot.slane %v892, %v896
      %v898 = vlaneseq
      %v899 = vshrl.u32 %v898, 7
      %v900 = vsub.s32 1, %v899
      %v901 = vrot.slane %v892, %v900
      %v904 = vmul.f32 %v889, %v897
      %v905 = vmul.f32 %v890, %v901
      %s906 = scalar_lea.vmem %s2, 144
      %v907 = vld [vmem:[%s906] sm:$0xff]
      %v908 = vld [vmem:[%s906 + $0x8] sm:$0xff]
      %v909 = vld [vmem:[%s906 + $0x10] sm:$0x3]
      %v911 = vsel %vm225, %v907, 0
      %v914 = vsel %vm225, %v908, 0
      %v917 = vsel %vm225, %v909, 0
      %919 = vmatprep.subr.mxu0 %v905
      %920 = vmatpush1.msra.mxu0 %v904
      %921 = vmatprep.subr.mxu0 0.0
      %922 = vmatpush1.msra.mxu0 0.0
      %923 = vmatprep.subr.mxu0 0.0
      %924 = vmatpush1.msra.mxu0 0.0
      %925 = vmatprep.subr.mxu0 0.0
      %926 = vmatpush1.msra.mxu0 0.0
      %927 = vmatprep.subr.mxu0 0.0
      %928 = vmatpush1.msra.mxu0 0.0
      %929 = vmatprep.subr.mxu0 0.0
      %930 = vmatpush1.msra.mxu0 0.0
      %931 = vmatprep.subr.mxu0 0.0
      %932 = vmatpush1.msra.mxu0 0.0
      %933 = vmatprep.subr.mxu0 0.0
      %934 = vmatpush1.msra.mxu0 0.0
      %935 = vmatprep.subr.mxu0 0.0
      %936 = vmatpush1.msra.mxu0 0.0
      %937 = vmatprep.subr.mxu0 0.0
      %938 = vmatpush1.msra.mxu0 0.0
      %939 = vmatprep.subr.mxu0 0.0
      %940 = vmatpush1.msra.mxu0 0.0
      %941 = vmatprep.subr.mxu0 0.0
      %942 = vmatpush1.msra.mxu0 0.0
      %943 = vmatprep.subr.mxu0 0.0
      %944 = vmatpush1.msra.mxu0 0.0
      %945 = vmatprep.subr.mxu0 0.0
      %946 = vmatpush1.msra.mxu0 0.0
      %947 = vmatprep.subr.mxu0 0.0
      %948 = vmatpush1.msra.mxu0 0.0
      %949 = vmatprep.subr.mxu0 0.0
      %950 = vmatpush1.msra.mxu0 0.0
      %951 = vmatprep.subr.mxu0 0.0
      %952 = vmatpush1.msra.mxu0 0.0
      %953 = vmatprep.subr.mxu0 0.0
      %954 = vmatpush1.msra.mxu0 0.0
      %955 = vmatprep.subr.mxu0 0.0
      %956 = vmatpush1.msra.mxu0 0.0
      %957 = vmatprep.subr.mxu0 0.0
      %958 = vmatpush1.msra.mxu0 0.0
      %959 = vmatprep.subr.mxu0 0.0
      %960 = vmatpush1.msra.mxu0 0.0
      %961 = vmatprep.subr.mxu0 0.0
      %962 = vmatpush1.msra.mxu0 0.0
      %963 = vmatprep.subr.mxu0 0.0
      %964 = vmatpush1.msra.mxu0 0.0
      %965 = vmatprep.subr.mxu0 0.0
      %966 = vmatpush1.msra.mxu0 0.0
      %967 = vmatprep.subr.mxu0 0.0
      %968 = vmatpush1.msra.mxu0 0.0
      %969 = vmatprep.subr.mxu0 0.0
      %970 = vmatpush1.msra.mxu0 0.0
      %971 = vmatprep.subr.mxu0 0.0
      %972 = vmatpush1.msra.mxu0 0.0
      %973 = vmatprep.subr.mxu0 0.0
      %974 = vmatpush1.msra.mxu0 0.0
      %975 = vmatprep.subr.mxu0 0.0
      %976 = vmatpush1.msra.mxu0 0.0
      %977 = vmatprep.subr.mxu0 0.0
      %978 = vmatpush1.msra.mxu0 0.0
      %979 = vmatprep.subr.mxu0 0.0
      %980 = vmatpush1.msra.mxu0 0.0
      %981 = vmatprep.subr.mxu0 0.0
      %982 = vmatpush1.msra.mxu0 0.0
      %983 = vmatprep.mubr.f32.mxu0 0.0
      %984 = vmatmul.mubr.f32.gmra.mrb[0].mxu0 %v911
      %v985 = vpop.f32.mrb[0].mxu0
      %v986 = vadd.f32 0.0, %v985
      %v987 = vpop.f32.mrb[0].mxu0
      %v988 = vadd.f32 0.0, %v987
      %989 = vmatprep.mubr.f32.mxu0 0.0
      %990 = vmatmul.mubr.f32.gmra.mrb[0].mxu0 %v914
      %v991 = vpop.f32.mrb[0].mxu0
      %v992 = vadd.f32 0.0, %v991
      %v993 = vpop.f32.mrb[0].mxu0
      %v994 = vadd.f32 0.0, %v993
      %995 = vmatprep.mubr.f32.mxu0 0.0
      %996 = vmatmul.mubr.f32.gmra.mrb[0].mxu0 %v917
      %v997 = vpop.f32.mrb[0].mxu0
      %v998 = vadd.f32 0.0, %v997
      %v999 = vpop.f32.mrb[0].mxu0
      %v1000 = vadd.f32 0.0, %v999
      %1001 = vdwg.mxu0
      %v1002 = vadd.f32 %v878, %v986
      %v1003 = vadd.f32 %v879, %v988
      %v1004 = vadd.f32 %v880, %v992
      %v1005 = vadd.f32 %v881, %v994
      %v1006 = vadd.f32 %v882, %v998
      %v1007 = vadd.f32 %v883, %v1000
      %1008 = vrot.lane.b32.xlu0 %v171, 112
      %v1009 = vpop.permute.xlu0 %1008
      %1010 = vrot.lane.b32.xlu0 %v172, 112
      %v1011 = vpop.permute.xlu0 %1010
      %vm1012 = vcmp.lt.s32.totalorder %v178, 112
      %v1013 = vsel %vm1012, %v1009, %v1011
      %v1014 = vsel %vm1012, %v1011, %v1009
      %s1015 = scalar_lea.vmem %s0, 7
      %v1016 = vld [vmem:[%s1015] ss:$8 sm:$0x3]
      %v1018 = vlaneseq
      %v1019 = vshrl.u32 %v1018, 7
      %v1020 = vsub.s32 0, %v1019
      %v1021 = vrot.slane %v1016, %v1020
      %v1022 = vlaneseq
      %v1023 = vshrl.u32 %v1022, 7
      %v1024 = vsub.s32 1, %v1023
      %v1025 = vrot.slane %v1016, %v1024
      %v1028 = vmul.f32 %v1013, %v1021
      %v1029 = vmul.f32 %v1014, %v1025
      %s1030 = scalar_lea.vmem %s2, 168
      %v1031 = vld [vmem:[%s1030] sm:$0xff]
      %v1032 = vld [vmem:[%s1030 + $0x8] sm:$0xff]
      %v1033 = vld [vmem:[%s1030 + $0x10] sm:$0x3]
      %v1035 = vsel %vm225, %v1031, 0
      %v1038 = vsel %vm225, %v1032, 0
      %v1041 = vsel %vm225, %v1033, 0
      %1043 = vmatprep.subr.mxu0 %v1029
      %1044 = vmatpush1.msra.mxu0 %v1028
      %1045 = vmatprep.subr.mxu0 0.0
      %1046 = vmatpush1.msra.mxu0 0.0
      %1047 = vmatprep.subr.mxu0 0.0
      %1048 = vmatpush1.msra.mxu0 0.0
      %1049 = vmatprep.subr.mxu0 0.0
      %1050 = vmatpush1.msra.mxu0 0.0
      %1051 = vmatprep.subr.mxu0 0.0
      %1052 = vmatpush1.msra.mxu0 0.0
      %1053 = vmatprep.subr.mxu0 0.0
      %1054 = vmatpush1.msra.mxu0 0.0
      %1055 = vmatprep.subr.mxu0 0.0
      %1056 = vmatpush1.msra.mxu0 0.0
      %1057 = vmatprep.subr.mxu0 0.0
      %1058 = vmatpush1.msra.mxu0 0.0
      %1059 = vmatprep.subr.mxu0 0.0
      %1060 = vmatpush1.msra.mxu0 0.0
      %1061 = vmatprep.subr.mxu0 0.0
      %1062 = vmatpush1.msra.mxu0 0.0
      %1063 = vmatprep.subr.mxu0 0.0
      %1064 = vmatpush1.msra.mxu0 0.0
      %1065 = vmatprep.subr.mxu0 0.0
      %1066 = vmatpush1.msra.mxu0 0.0
      %1067 = vmatprep.subr.mxu0 0.0
      %1068 = vmatpush1.msra.mxu0 0.0
      %1069 = vmatprep.subr.mxu0 0.0
      %1070 = vmatpush1.msra.mxu0 0.0
      %1071 = vmatprep.subr.mxu0 0.0
      %1072 = vmatpush1.msra.mxu0 0.0
      %1073 = vmatprep.subr.mxu0 0.0
      %1074 = vmatpush1.msra.mxu0 0.0
      %1075 = vmatprep.subr.mxu0 0.0
      %1076 = vmatpush1.msra.mxu0 0.0
      %1077 = vmatprep.subr.mxu0 0.0
      %1078 = vmatpush1.msra.mxu0 0.0
      %1079 = vmatprep.subr.mxu0 0.0
      %1080 = vmatpush1.msra.mxu0 0.0
      %1081 = vmatprep.subr.mxu0 0.0
      %1082 = vmatpush1.msra.mxu0 0.0
      %1083 = vmatprep.subr.mxu0 0.0
      %1084 = vmatpush1.msra.mxu0 0.0
      %1085 = vmatprep.subr.mxu0 0.0
      %1086 = vmatpush1.msra.mxu0 0.0
      %1087 = vmatprep.subr.mxu0 0.0
      %1088 = vmatpush1.msra.mxu0 0.0
      %1089 = vmatprep.subr.mxu0 0.0
      %1090 = vmatpush1.msra.mxu0 0.0
      %1091 = vmatprep.subr.mxu0 0.0
      %1092 = vmatpush1.msra.mxu0 0.0
      %1093 = vmatprep.subr.mxu0 0.0
      %1094 = vmatpush1.msra.mxu0 0.0
      %1095 = vmatprep.subr.mxu0 0.0
      %1096 = vmatpush1.msra.mxu0 0.0
      %1097 = vmatprep.subr.mxu0 0.0
      %1098 = vmatpush1.msra.mxu0 0.0
      %1099 = vmatprep.subr.mxu0 0.0
      %1100 = vmatpush1.msra.mxu0 0.0
      %1101 = vmatprep.subr.mxu0 0.0
      %1102 = vmatpush1.msra.mxu0 0.0
      %1103 = vmatprep.subr.mxu0 0.0
      %1104 = vmatpush1.msra.mxu0 0.0
      %1105 = vmatprep.subr.mxu0 0.0
      %1106 = vmatpush1.msra.mxu0 0.0
      %1107 = vmatprep.mubr.f32.mxu0 0.0
      %1108 = vmatmul.mubr.f32.gmra.mrb[0].mxu0 %v1035
      %v1109 = vpop.f32.mrb[0].mxu0
      %v1110 = vadd.f32 0.0, %v1109
      %v1111 = vpop.f32.mrb[0].mxu0
      %v1112 = vadd.f32 0.0, %v1111
      %1113 = vmatprep.mubr.f32.mxu0 0.0
      %1114 = vmatmul.mubr.f32.gmra.mrb[0].mxu0 %v1038
      %v1115 = vpop.f32.mrb[0].mxu0
      %v1116 = vadd.f32 0.0, %v1115
      %v1117 = vpop.f32.mrb[0].mxu0
      %v1118 = vadd.f32 0.0, %v1117
      %1119 = vmatprep.mubr.f32.mxu0 0.0
      %1120 = vmatmul.mubr.f32.gmra.mrb[0].mxu0 %v1041
      %v1121 = vpop.f32.mrb[0].mxu0
      %v1122 = vadd.f32 0.0, %v1121
      %v1123 = vpop.f32.mrb[0].mxu0
      %v1124 = vadd.f32 0.0, %v1123
      %1125 = vdwg.mxu0
      %v1126 = vadd.f32 %v1002, %v1110
      %v1127 = vadd.f32 %v1003, %v1112
      %v1128 = vadd.f32 %v1004, %v1116
      %v1129 = vadd.f32 %v1005, %v1118
      %v1130 = vadd.f32 %v1006, %v1122
      %v1131 = vadd.f32 %v1007, %v1124
      %1132 = vrot.lane.b32.xlu0 %v171, 111
      %v1133 = vpop.permute.xlu0 %1132
      %1134 = vrot.lane.b32.xlu0 %v172, 111
      %v1135 = vpop.permute.xlu0 %1134
      %vm1136 = vcmp.lt.s32.totalorder %v178, 111
      %v1137 = vsel %vm1136, %v1133, %v1135
      %v1138 = vsel %vm1136, %v1135, %v1133
      %s1139 = scalar_lea.vmem %s0, 16
      %v1140 = vld [vmem:[%s1139] ss:$8 sm:$0x3]
      %v1142 = vlaneseq
      %v1143 = vshrl.u32 %v1142, 7
      %v1144 = vsub.s32 0, %v1143
      %v1145 = vrot.slane %v1140, %v1144
      %v1146 = vlaneseq
      %v1147 = vshrl.u32 %v1146, 7
      %v1148 = vsub.s32 1, %v1147
      %v1149 = vrot.slane %v1140, %v1148
      %v1152 = vmul.f32 %v1137, %v1145
      %v1153 = vmul.f32 %v1138, %v1149
      %s1154 = scalar_lea.vmem %s2, 192
      %v1155 = vld [vmem:[%s1154] sm:$0xff]
      %v1156 = vld [vmem:[%s1154 + $0x8] sm:$0xff]
      %v1157 = vld [vmem:[%s1154 + $0x10] sm:$0x3]
      %v1159 = vsel %vm225, %v1155, 0
      %v1162 = vsel %vm225, %v1156, 0
      %v1165 = vsel %vm225, %v1157, 0
      %1167 = vmatprep.subr.mxu0 %v1153
      %1168 = vmatpush1.msra.mxu0 %v1152
      %1169 = vmatprep.subr.mxu0 0.0
      %1170 = vmatpush1.msra.mxu0 0.0
      %1171 = vmatprep.subr.mxu0 0.0
      %1172 = vmatpush1.msra.mxu0 0.0
      %1173 = vmatprep.subr.mxu0 0.0
      %1174 = vmatpush1.msra.mxu0 0.0
      %1175 = vmatprep.subr.mxu0 0.0
      %1176 = vmatpush1.msra.mxu0 0.0
      %1177 = vmatprep.subr.mxu0 0.0
      %1178 = vmatpush1.msra.mxu0 0.0
      %1179 = vmatprep.subr.mxu0 0.0
      %1180 = vmatpush1.msra.mxu0 0.0
      %1181 = vmatprep.subr.mxu0 0.0
      %1182 = vmatpush1.msra.mxu0 0.0
      %1183 = vmatprep.subr.mxu0 0.0
      %1184 = vmatpush1.msra.mxu0 0.0
      %1185 = vmatprep.subr.mxu0 0.0
      %1186 = vmatpush1.msra.mxu0 0.0
      %1187 = vmatprep.subr.mxu0 0.0
      %1188 = vmatpush1.msra.mxu0 0.0
      %1189 = vmatprep.subr.mxu0 0.0
      %1190 = vmatpush1.msra.mxu0 0.0
      %1191 = vmatprep.subr.mxu0 0.0
      %1192 = vmatpush1.msra.mxu0 0.0
      %1193 = vmatprep.subr.mxu0 0.0
      %1194 = vmatpush1.msra.mxu0 0.0
      %1195 = vmatprep.subr.mxu0 0.0
      %1196 = vmatpush1.msra.mxu0 0.0
      %1197 = vmatprep.subr.mxu0 0.0
      %1198 = vmatpush1.msra.mxu0 0.0
      %1199 = vmatprep.subr.mxu0 0.0
      %1200 = vmatpush1.msra.mxu0 0.0
      %1201 = vmatprep.subr.mxu0 0.0
      %1202 = vmatpush1.msra.mxu0 0.0
      %1203 = vmatprep.subr.mxu0 0.0
      %1204 = vmatpush1.msra.mxu0 0.0
      %1205 = vmatprep.subr.mxu0 0.0
      %1206 = vmatpush1.msra.mxu0 0.0
      %1207 = vmatprep.subr.mxu0 0.0
      %1208 = vmatpush1.msra.mxu0 0.0
      %1209 = vmatprep.subr.mxu0 0.0
      %1210 = vmatpush1.msra.mxu0 0.0
      %1211 = vmatprep.subr.mxu0 0.0
      %1212 = vmatpush1.msra.mxu0 0.0
      %1213 = vmatprep.subr.mxu0 0.0
      %1214 = vmatpush1.msra.mxu0 0.0
      %1215 = vmatprep.subr.mxu0 0.0
      %1216 = vmatpush1.msra.mxu0 0.0
      %1217 = vmatprep.subr.mxu0 0.0
      %1218 = vmatpush1.msra.mxu0 0.0
      %1219 = vmatprep.subr.mxu0 0.0
      %1220 = vmatpush1.msra.mxu0 0.0
      %1221 = vmatprep.subr.mxu0 0.0
      %1222 = vmatpush1.msra.mxu0 0.0
      %1223 = vmatprep.subr.mxu0 0.0
      %1224 = vmatpush1.msra.mxu0 0.0
      %1225 = vmatprep.subr.mxu0 0.0
      %1226 = vmatpush1.msra.mxu0 0.0
      %1227 = vmatprep.subr.mxu0 0.0
      %1228 = vmatpush1.msra.mxu0 0.0
      %1229 = vmatprep.subr.mxu0 0.0
      %1230 = vmatpush1.msra.mxu0 0.0
      %1231 = vmatprep.mubr.f32.mxu0 0.0
      %1232 = vmatmul.mubr.f32.gmra.mrb[0].mxu0 %v1159
      %v1233 = vpop.f32.mrb[0].mxu0
      %v1234 = vadd.f32 0.0, %v1233
      %v1235 = vpop.f32.mrb[0].mxu0
      %v1236 = vadd.f32 0.0, %v1235
      %1237 = vmatprep.mubr.f32.mxu0 0.0
      %1238 = vmatmul.mubr.f32.gmra.mrb[0].mxu0 %v1162
      %v1239 = vpop.f32.mrb[0].mxu0
      %v1240 = vadd.f32 0.0, %v1239
      %v1241 = vpop.f32.mrb[0].mxu0
      %v1242 = vadd.f32 0.0, %v1241
      %1243 = vmatprep.mubr.f32.mxu0 0.0
      %1244 = vmatmul.mubr.f32.gmra.mrb[0].mxu0 %v1165
      %v1245 = vpop.f32.mrb[0].mxu0
      %v1246 = vadd.f32 0.0, %v1245
      %v1247 = vpop.f32.mrb[0].mxu0
      %v1248 = vadd.f32 0.0, %v1247
      %1249 = vdwg.mxu0
      %v1250 = vadd.f32 %v1126, %v1234
      %v1251 = vadd.f32 %v1127, %v1236
      %v1252 = vadd.f32 %v1128, %v1240
      %v1253 = vadd.f32 %v1129, %v1242
      %v1254 = vadd.f32 %v1130, %v1246
      %v1255 = vadd.f32 %v1131, %v1248
      %1256 = vst [vmem:[%s170] sm:$0xff] %v1250
      %1257 = vst [vmem:[%s170 + $0x8] sm:$0xff] %v1251
      %1258 = vst [vmem:[%s170 + $0x10] sm:$0xff] %v1252
      %1259 = vst [vmem:[%s170 + $0x18] sm:$0xff] %v1253
      %1260 = vst [vmem:[%s170 + $0x20] sm:$0x3] %v1254
      %1261 = vst [vmem:[%s170 + $0x28] sm:$0x3] %v1255
      %p1262 = scmp.lt.s32.totalorder %s14, 1
      %s1263 = scalar_select %p1262, %s14, 1
      %s1264 = smul.addr %s1263, 6
      %s1265 = smul.addr %s1264, 8
      %s1266 = scalar_lea.vmem %s3, %s1265
      // Predicated region
      $region33: #{cf_forward.4} parent=31 // pred_check
        %p1267 = pneg %p100
      $region34: #{cf_forward.4} parent=31 // pred_check_branch
        %1269 = sbr.rel (%p1267) target = $region36
      $region35: #{cf_forward.4} parent=31 // pred_region
        _
      $region36: #{cf_forward.4} parent=31 // pred_fallthru
        _
    $region32: #{cf_forward.4} parent=5 // pred_fallthru
      _
    %p1270 = scmp.le.s32.totalorder 2, %s9
    // Predicated region
    $region37: #{cf_forward.4} parent=5 // pred_check
      %p1271 = pneg %p1270
    $region38: #{cf_forward.4} parent=5 // pred_check_branch
      %1273 = sbr.rel (%p1271) target = $region40
    $region39: #{cf_forward.4} parent=5 // pred_region
      %s1274 = ssub.s32 %s9, 2
      // Predicated region
      $region41: #{cf_forward.4} parent=39 // pred_check
        %p1275 = pneg %p106
      $region42: #{cf_forward.4} parent=39 // pred_check_branch
        %1277 = sbr.rel (%p1275) target = $region44
      $region43: #{cf_forward.4} parent=39 // pred_region
        %p1278 = scmp.lt.s32.totalorder %s15, 1
        %s1279 = scalar_select %p1278, %s15, 1
        %s1280 = smul.addr %s1279, 6
        %s1281 = smul.addr %s1280, 8
        %s1282 = scalar_lea.vmem %s3, %s1281
      $region44: #{cf_forward.4} parent=39 // pred_fallthru
        _
    $region40: #{cf_forward.4} parent=5 // pred_fallthru
      _
  $region6: #{cf_forward.4} parent=0 // loop_footer
    %s13 = sadd.s32 1, %s9
  $region7: #{cf_forward.4} parent=0 // loop_footer_branch
    %8 = sbr.rel target = $region3
  $region8: #{cf_forward.4} parent=0 // loop_exit
    _

// kernel: cf_forward.5
$region0: #{cf_forward.5}
  #allocation0 [shape = 'u32[]', space=smem, size = 0x4, offset = 0x4, fixed_abs, tag = 'smem constant byte address 0x4 - core index']
  #allocation1 [shape = 'u32[144,128]{1,0:T(1,128)}', space=vmem, size = 0x12000, scoped, tag = 'internal scratch']
  %s0 = inlined_call_operand.vmem [shape: f32[2,72,256], index: 0, kind: input, shape index: {}]
  %s1 = inlined_call_operand.vmem [shape: f32[8,72], index: 1, kind: input, shape index: {}]
  %s2 = inlined_call_operand.vmem [shape: f32[8,1], index: 2, kind: input, shape index: {}]
  %s3 = inlined_call_operand.vmem [shape: f32[2,8,256], index: 3, kind: output, shape index: {}]
  %s4 = sld [smem:[#allocation0]]
  $region45: #{cf_forward.5} parent=0
    _
  %s6 = ssub.s32 1, %s4
  %s7 = scalar_select 0, %s6, %s4
  loop: start=0, step=1, limit=4
  $region2: #{cf_forward.5} parent=0 // loop_pre_header
    _
  $region3: #{cf_forward.5} parent=0 // loop_header
    %s9 = sphi 0, %s13
    %p10 = scmp.ge.s32.totalorder %s9, 4
    %s16 = sphi 0, %s28
    %s17 = sphi 0, %s24
    %s18 = sphi 0, %s16
    %s19 = sphi 0, %s17
    %s20 = sphi 0, %s18
    %s21 = sphi 0, %s19
    %s33 = sphi 0, %s35
    %s36 = sphi 0, %s33
    %s37 = sphi 0, %s36
    %s53 = sphi 0, %s37
    %s57 = sphi 0, %s57
    %s59 = sphi 0, %s57
    %s60 = sphi 0, %s59
    %s74 = sphi 0, %s60
    %s78 = sphi 0, %s78
    %s80 = sphi 0, %s78
    %s81 = sphi 0, %s80
    %s95 = sphi 0, %s81
    %s103 = sphi 0, %s105
    %s106 = sphi 0, %s103
    %s107 = sphi 0, %s106
    %s123 = sphi 0, %s107
  $region4: #{cf_forward.5} parent=0 // loop_header_branch
    %12 = sbr.rel (%p10) target = $region8
  $region5: #{cf_forward.5} parent=0 // loop_body
    %s14 = ssub.s32 %s9, 1
    %s15 = ssub.s32 %s9, 2
    %s22 = sadd.s32 1, %s17
    %p23 = scmp.ge.s32.totalorder %s22, 1
    %s24 = scalar_select %p23, 0, %s22
    %s25 = sadd.s32 1, %s16
    %s26 = scalar_select %p23, %s25, %s16
    %p27 = scmp.ge.s32.totalorder %s26, 2
    %s28 = scalar_select %p27, 0, %s26
    %s29 = ssub.s32 %s16, %s28
    %s30 = ssub.s32 %s17, %s24
    %s31 = sor.u32 %s29, %s30
    %p32 = scmp.eq.s32.totalorder %s31, 0
    %s34 = sadd.s32 %s33, 1
    %s35 = scalar_select %p32, %s33, %s34
    %p38 = pneg %p32
    %p39 = scmp.eq.s32.totalorder %s9, 1
    %p40 = por %p38, %p39
    %p41 = scmp.ne.s32.totalorder %s33, %s36
    %p42 = scmp.eq.s32.totalorder %s9, 0
    %p43 = por %p41, %p42
    %p44 = scmp.ne.s32.totalorder %s33, %s36
    %p45 = scmp.eq.s32.totalorder %s14, 1
    %p46 = por %p44, %p45
    %p47 = scmp.ne.s32.totalorder %s36, %s37
    %p48 = scmp.eq.s32.totalorder %s14, 0
    %p49 = por %p47, %p48
    %p50 = scmp.ne.s32.totalorder %s36, %s37
    %p51 = scmp.eq.s32.totalorder %s15, 1
    %p52 = por %p50, %p51
    %p54 = scmp.ne.s32.totalorder %s37, %s53
    %p55 = scmp.eq.s32.totalorder %s15, 0
    %p56 = por %p54, %p55
    %s58 = sadd.s32 %s57, 1
    %p61 = scmp.eq.s32.totalorder %s9, 1
    %p62 = scmp.ne.s32.totalorder %s57, %s59
    %p63 = scmp.eq.s32.totalorder %s9, 0
    %p64 = por %p62, %p63
    %p65 = scmp.ne.s32.totalorder %s57, %s59
    %p66 = scmp.eq.s32.totalorder %s14, 1
    %p67 = por %p65, %p66
    %p68 = scmp.ne.s32.totalorder %s59, %s60
    %p69 = scmp.eq.s32.totalorder %s14, 0
    %p70 = por %p68, %p69
    %p71 = scmp.ne.s32.totalorder %s59, %s60
    %p72 = scmp.eq.s32.totalorder %s15, 1
    %p73 = por %p71, %p72
    %p75 = scmp.ne.s32.totalorder %s60, %s74
    %p76 = scmp.eq.s32.totalorder %s15, 0
    %p77 = por %p75, %p76
    %s79 = sadd.s32 %s78, 1
    %p82 = scmp.eq.s32.totalorder %s9, 1
    %p83 = scmp.ne.s32.totalorder %s78, %s80
    %p84 = scmp.eq.s32.totalorder %s9, 0
    %p85 = por %p83, %p84
    %p86 = scmp.ne.s32.totalorder %s78, %s80
    %p87 = scmp.eq.s32.totalorder %s14, 1
    %p88 = por %p86, %p87
    %p89 = scmp.ne.s32.totalorder %s80, %s81
    %p90 = scmp.eq.s32.totalorder %s14, 0
    %p91 = por %p89, %p90
    %p92 = scmp.ne.s32.totalorder %s80, %s81
    %p93 = scmp.eq.s32.totalorder %s15, 1
    %p94 = por %p92, %p93
    %p96 = scmp.ne.s32.totalorder %s81, %s95
    %p97 = scmp.eq.s32.totalorder %s15, 0
    %p98 = por %p96, %p97
    %s99 = ssub.s32 %s16, %s28
    %s100 = ssub.s32 %s17, %s24
    %s101 = sor.u32 %s99, %s100
    %p102 = scmp.eq.s32.totalorder %s101, 0
    %s104 = sadd.s32 %s103, 1
    %s105 = scalar_select %p102, %s103, %s104
    %p108 = pneg %p102
    %p109 = scmp.eq.s32.totalorder %s9, 1
    %p110 = por %p108, %p109
    %p111 = scmp.ne.s32.totalorder %s103, %s106
    %p112 = scmp.eq.s32.totalorder %s9, 0
    %p113 = por %p111, %p112
    %p114 = scmp.ne.s32.totalorder %s103, %s106
    %p115 = scmp.eq.s32.totalorder %s14, 1
    %p116 = por %p114, %p115
    %p117 = scmp.ne.s32.totalorder %s106, %s107
    %p118 = scmp.eq.s32.totalorder %s14, 0
    %p119 = por %p117, %p118
    %p120 = scmp.ne.s32.totalorder %s106, %s107
    %p121 = scmp.eq.s32.totalorder %s15, 1
    %p122 = por %p120, %p121
    %p124 = scmp.ne.s32.totalorder %s107, %s123
    %p125 = scmp.eq.s32.totalorder %s15, 0
    %p126 = por %p124, %p125
    %p127 = scmp.le.s32.totalorder 1, %s9
    %p128 = scmp.lt.s32.totalorder %s9, 3
    %p129 = pnand %p127, %p128
    %p130 = pneg %p129
    // Predicated region
    $region9: #{cf_forward.5} parent=5 // pred_check
      _
    $region10: #{cf_forward.5} parent=5 // pred_check_branch
      %132 = sbr.rel (%p129) target = $region12
    $region11: #{cf_forward.5} parent=5 // pred_region
      %s133 = ssub.s32 %s9, 1
      // Predicated region
      $region13: #{cf_forward.5} parent=11 // pred_check
        %p134 = pneg %p70
      $region14: #{cf_forward.5} parent=11 // pred_check_branch
        %136 = sbr.rel (%p134) target = $region16
      $region15: #{cf_forward.5} parent=11 // pred_region
        _
      $region16: #{cf_forward.5} parent=11 // pred_fallthru
        _
      // Predicated region
      $region17: #{cf_forward.5} parent=11 // pred_check
        %p137 = pneg %p91
      $region18: #{cf_forward.5} parent=11 // pred_check_branch
        %139 = sbr.rel (%p137) target = $region20
      $region19: #{cf_forward.5} parent=11 // pred_region
        _
      $region20: #{cf_forward.5} parent=11 // pred_fallthru
        _
    $region12: #{cf_forward.5} parent=5 // pred_fallthru
      _
    %p140 = scmp.lt.s32.totalorder %s9, 2
    // Predicated region
    $region21: #{cf_forward.5} parent=5 // pred_check
      %p141 = pneg %p140
    $region22: #{cf_forward.5} parent=5 // pred_check_branch
      %143 = sbr.rel (%p141) target = $region24
    $region23: #{cf_forward.5} parent=5 // pred_region
      // Predicated region
      $region25: #{cf_forward.5} parent=23 // pred_check
        %p144 = pneg %p43
      $region26: #{cf_forward.5} parent=23 // pred_check_branch
        %146 = sbr.rel (%p144) target = $region28
      $region27: #{cf_forward.5} parent=23 // pred_region
        %s147 = smul.u32 2, %s17
        %p148 = scmp.lt.s32.totalorder %s16, 1
        %s149 = scalar_select %p148, %s16, 1
        %p150 = scmp.lt.s32.totalorder %s147, 1
        %s151 = scalar_select %p150, %s147, 1
        %s152 = smul.addr %s149, 18
        %s153 = sadd.s32 %s151, %s152
        %s154 = smul.addr %s153, 8
        %s155 = scalar_lea.vmem %s0, %s154
        %s156 = smul.u32 2, %s17
      $region28: #{cf_forward.5} parent=23 // pred_fallthru
        _
    $region24: #{cf_forward.5} parent=5 // pred_fallthru
      _
    %p157 = scmp.le.s32.totalorder 1, %s9
    %p158 = scmp.lt.s32.totalorder %s9, 3
    %p159 = pnand %p157, %p158
    %p160 = pneg %p159
    // Predicated region
    $region29: #{cf_forward.5} parent=5 // pred_check
      _
    $region30: #{cf_forward.5} parent=5 // pred_check_branch
      %162 = sbr.rel (%p159) target = $region32
    $region31: #{cf_forward.5} parent=5 // pred_region
      %s163 = ssub.s32 %s9, 1
      %s164 = smul.u32 2, %s19
      %p165 = scmp.lt.s32.totalorder %s18, 1
      %s166 = scalar_select %p165, %s18, 1
      %p167 = scmp.lt.s32.totalorder %s164, 1
      %s168 = scalar_select %p167, %s164, 1
      %s169 = smul.addr %s166, 18
      %s170 = sadd.s32 %s168, %s169
      %s171 = smul.addr %s170, 8
      %s172 = scalar_lea.vmem %s0, %s171
      %p173 = pneg %p49
      %p174 = pneg %p46
      %p175 = pneg %p70
      %p176 = pneg %p67
      %p177 = pneg %p91
      %p178 = pneg %p88
      %p179 = pneg %p119
      %p180 = pneg %p116
      %s181 = smul.u32 2, %s19
      %p182 = scmp.lt.s32.totalorder %s18, 1
      %s183 = scalar_select %p182, %s18, 1
      %p184 = scmp.lt.s32.totalorder %s181, 1
      %s185 = scalar_select %p184, %s181, 1
      %s186 = smul.addr %s183, 2
      %s187 = sadd.s32 %s185, %s186
      %s188 = smul.addr %s187, 8
      %s189 = scalar_lea.vmem %s3, %s188
      %s190 = smul.u32 2, %s19
      %p191 = scmp.lt.s32.totalorder %s18, 1
      %s192 = scalar_select %p191, %s18, 1
      %p193 = scmp.lt.s32.totalorder %s190, 1
      %s194 = scalar_select %p193, %s190, 1
      %s195 = smul.addr %s192, 18
      %s196 = sadd.s32 %s194, %s195
      %s197 = smul.addr %s196, 8
      %s198 = scalar_lea.vmem %s0, %s197
      %s199 = smul.u32 2, %s19
      %s200 = smul.u32 2, %s19
      %p201 = scmp.lt.s32.totalorder %s18, 1
      %s202 = scalar_select %p201, %s18, 1
      %p203 = scmp.lt.s32.totalorder %s200, 1
      %s204 = scalar_select %p203, %s200, 1
      %s205 = smul.addr %s202, 2
      %s206 = sadd.s32 %s204, %s205
      %s207 = smul.addr %s206, 8
      %s208 = scalar_lea.vmem %s3, %s207
      %s209 = smul.u32 2, %s19
      %v210 = vld [vmem:[%s1] sm:$0xff]
      %v211 = vld [vmem:[%s198] sm:$0xff]
      %v212 = vld [vmem:[%s198 + $0x8] sm:$0xff]
      %v213 = vld [vmem:[%s198 + $0x10] sm:$0xff]
      %v214 = vld [vmem:[%s198 + $0x18] sm:$0xff]
      %v215 = vld [vmem:[%s198 + $0x20] sm:$0xff]
      %v216 = vld [vmem:[%s198 + $0x28] sm:$0xff]
      %v217 = vld [vmem:[%s198 + $0x30] sm:$0xff]
      %v218 = vld [vmem:[%s198 + $0x38] sm:$0xff]
      %v219 = vld [vmem:[%s198 + $0x40] sm:$0xff]
      %v220 = vld [vmem:[%s198 + $0x48] sm:$0xff]
      %v221 = vld [vmem:[%s198 + $0x50] sm:$0xff]
      %v222 = vld [vmem:[%s198 + $0x58] sm:$0xff]
      %v223 = vld [vmem:[%s198 + $0x60] sm:$0xff]
      %v224 = vld [vmem:[%s198 + $0x68] sm:$0xff]
      %v225 = vld [vmem:[%s198 + $0x70] sm:$0xff]
      %v226 = vld [vmem:[%s198 + $0x78] sm:$0xff]
      %v227 = vld [vmem:[%s198 + $0x80] sm:$0xff]
      %v228 = vld [vmem:[%s198 + $0x88] sm:$0xff]
      %v229 = vld [vmem:[%s2] sm:$0xff]
      %231 = vset.pattern.permute.xlu0 0
      %232 = vperm.xlu0 %231, %v229
      %v233 = vpop.permute.xlu0 %232
      %vm235 = vcmask 588800
      %v237 = vsel %vm235, %v210, 0
      %239 = vmatprep.subr.mxu0 %v212
      %240 = vmatpush1.msra.mxu0 %v211
      %241 = vmatprep.subr.mxu0 %v214
      %242 = vmatpush1.msra.mxu0 %v213
      %243 = vmatprep.subr.mxu0 %v216
      %244 = vmatpush1.msra.mxu0 %v215
      %245 = vmatprep.subr.mxu0 %v218
      %246 = vmatpush1.msra.mxu0 %v217
      %247 = vmatprep.subr.mxu0 %v220
      %248 = vmatpush1.msra.mxu0 %v219
      %249 = vmatprep.subr.mxu0 %v222
      %250 = vmatpush1.msra.mxu0 %v221
      %251 = vmatprep.subr.mxu0 %v224
      %252 = vmatpush1.msra.mxu0 %v223
      %253 = vmatprep.subr.mxu0 %v226
      %254 = vmatpush1.msra.mxu0 %v225
      %255 = vmatprep.subr.mxu0 %v228
      %256 = vmatpush1.msra.mxu0 %v227
      %257 = vmatprep.subr.mxu0 0.0
      %258 = vmatpush1.msra.mxu0 0.0
      %259 = vmatprep.subr.mxu0 0.0
      %260 = vmatpush1.msra.mxu0 0.0
      %261 = vmatprep.subr.mxu0 0.0
      %262 = vmatpush1.msra.mxu0 0.0
      %263 = vmatprep.subr.mxu0 0.0
      %264 = vmatpush1.msra.mxu0 0.0
      %265 = vmatprep.subr.mxu0 0.0
      %266 = vmatpush1.msra.mxu0 0.0
      %267 = vmatprep.subr.mxu0 0.0
      %268 = vmatpush1.msra.mxu0 0.0
      %269 = vmatprep.subr.mxu0 0.0
      %270 = vmatpush1.msra.mxu0 0.0
      %271 = vmatprep.subr.mxu0 0.0
      %272 = vmatpush1.msra.mxu0 0.0
      %273 = vmatprep.subr.mxu0 0.0
      %274 = vmatpush1.msra.mxu0 0.0
      %275 = vmatprep.subr.mxu0 0.0
      %276 = vmatpush1.msra.mxu0 0.0
      %277 = vmatprep.subr.mxu0 0.0
      %278 = vmatpush1.msra.mxu0 0.0
      %279 = vmatprep.subr.mxu0 0.0
      %280 = vmatpush1.msra.mxu0 0.0
      %281 = vmatprep.subr.mxu0 0.0
      %282 = vmatpush1.msra.mxu0 0.0
      %283 = vmatprep.subr.mxu0 0.0
      %284 = vmatpush1.msra.mxu0 0.0
      %285 = vmatprep.subr.mxu0 0.0
      %286 = vmatpush1.msra.mxu0 0.0
      %287 = vmatprep.subr.mxu0 0.0
      %288 = vmatpush1.msra.mxu0 0.0
      %289 = vmatprep.subr.mxu0 0.0
      %290 = vmatpush1.msra.mxu0 0.0
      %291 = vmatprep.subr.mxu0 0.0
      %292 = vmatpush1.msra.mxu0 0.0
      %293 = vmatprep.subr.mxu0 0.0
      %294 = vmatpush1.msra.mxu0 0.0
      %295 = vmatprep.subr.mxu0 0.0
      %296 = vmatpush1.msra.mxu0 0.0
      %297 = vmatprep.subr.mxu0 0.0
      %298 = vmatpush1.msra.mxu0 0.0
      %299 = vmatprep.subr.mxu0 0.0
      %300 = vmatpush1.msra.mxu0 0.0
      %301 = vmatprep.subr.mxu0 0.0
      %302 = vmatpush1.msra.mxu0 0.0
      %303 = vmatprep.mubr.f32.mxu0 0.0
      %304 = vmatmul.mubr.f32.gmra.mrb[0].mxu0 %v237
      %v305 = vpop.f32.mrb[0].mxu0
      %v306 = vadd.f32 %v233, %v305
      %v307 = vpop.f32.mrb[0].mxu0
      %v308 = vadd.f32 %v233, %v307
      %309 = vdwg.mxu0
      %310 = vst [vmem:[%s208] sm:$0xff] %v306
      %311 = vst [vmem:[%s208 + $0x8] sm:$0xff] %v308
      %s312 = smul.u32 2, %s19
      %p313 = scmp.lt.s32.totalorder %s18, 1
      %s314 = scalar_select %p313, %s18, 1
      %p315 = scmp.lt.s32.totalorder %s312, 1
      %s316 = scalar_select %p315, %s312, 1
      %s317 = smul.addr %s314, 2
      %s318 = sadd.s32 %s316, %s317
      %s319 = smul.addr %s318, 8
      %s320 = scalar_lea.vmem %s3, %s319
      // Predicated region
      $region33: #{cf_forward.5} parent=31 // pred_check
        %p321 = pneg %p116
      $region34: #{cf_forward.5} parent=31 // pred_check_branch
        %323 = sbr.rel (%p321) target = $region36
      $region35: #{cf_forward.5} parent=31 // pred_region
        %s324 = smul.u32 2, %s19
      $region36: #{cf_forward.5} parent=31 // pred_fallthru
        _
    $region32: #{cf_forward.5} parent=5 // pred_fallthru
      _
    %p325 = scmp.le.s32.totalorder 2, %s9
    // Predicated region
    $region37: #{cf_forward.5} parent=5 // pred_check
      %p326 = pneg %p325
    $region38: #{cf_forward.5} parent=5 // pred_check_branch
      %328 = sbr.rel (%p326) target = $region40
    $region39: #{cf_forward.5} parent=5 // pred_region
      %s329 = ssub.s32 %s9, 2
      // Predicated region
      $region41: #{cf_forward.5} parent=39 // pred_check
        %p330 = pneg %p122
      $region42: #{cf_forward.5} parent=39 // pred_check_branch
        %332 = sbr.rel (%p330) target = $region44
      $region43: #{cf_forward.5} parent=39 // pred_region
        %s333 = smul.u32 2, %s21
        %p334 = scmp.lt.s32.totalorder %s20, 1
        %s335 = scalar_select %p334, %s20, 1
        %p336 = scmp.lt.s32.totalorder %s333, 1
        %s337 = scalar_select %p336, %s333, 1
        %s338 = smul.addr %s335, 2
        %s339 = sadd.s32 %s337, %s338
        %s340 = smul.addr %s339, 8
        %s341 = scalar_lea.vmem %s3, %s340
      $region44: #{cf_forward.5} parent=39 // pred_fallthru
        _
    $region40: #{cf_forward.5} parent=5 // pred_fallthru
      _
  $region6: #{cf_forward.5} parent=0 // loop_footer
    %s13 = sadd.s32 1, %s9
  $region7: #{cf_forward.5} parent=0 // loop_footer_branch
    %8 = sbr.rel target = $region3
  $region8: #{cf_forward.5} parent=0 // loop_exit
    _

</llo_original>
